<compile_context>
chip_gen: v6e
topology: v6e:2x2x1
jax: 0.10.0
libtpu: 0.0.40
codegen_flags: <defaults>
</compile_context>

<pallas_src>
import math

import jax
import jax.numpy as jnp
from jax.experimental import pallas as pl
from jax.experimental.pallas import tpu as pltpu


def _round_up(x, m):
    return ((x + m - 1) // m) * m


# ----------------------------------------------------------------------------
# Fused Pallas kernel: 1x1 conv + sigmoid + YOLO box decode.
# ----------------------------------------------------------------------------
def _make_detect_kernel(tile_rows, cout_pad, with_raw):
    """Detect-head kernel for one (tile_rows, cin) row tile.

    Refs (per grid step i):
      meta_ref : SMEM (4*num_tiles,) int32 flat [level, row_start, nx, ny]*T
      x_ref    : VMEM (tile_rows, cin)      bf16 activations, rows = (b, y, x)
      w_ref    : VMEM (cin, cout_pad)       bf16 1x1-conv weight of this level
      b_ref    : VMEM (1, cout_pad)         f32 bias
      c_ref    : VMEM (8, cout_pad)         f32 per-level lane tables:
                   row0 stride, row1 anchor w/h,
                   row2 m_x (r==0), row3 m_y (r==1),
                   row4 m_box1 (r<2), row5 m_box2 (2<=r<4), row6 m_score (r>=4)
      raw_ref  : VMEM (tile_rows, cout_pad) f32 conv output (pre-sigmoid) [opt]
      pred_ref : VMEM (tile_rows, cout_pad) f32 decoded [x1,y1,x2,y2,scores]*na
    """

    def kernel(meta_ref, x_ref, w_ref, b_ref, c_ref, *out_refs):
        if with_raw:
            raw_ref, pred_ref = out_refs
        else:
            (pred_ref,) = out_refs
        i = pl.program_id(0)

        # ---- 1x1 conv == MXU matmul (bf16 in, f32 accumulation) + bias -----
        z = jnp.dot(x_ref[...], w_ref[...], preferred_element_type=jnp.float32)
        z = z + b_ref[...]
        if with_raw:
            raw_ref[...] = z

        # ---- decode ---------------------------------------------------------
        y = jax.nn.sigmoid(z)                    # EUP slot

        stride_vec = c_ref[0:1, :]               # (1, cout_pad) lane tables
        anchor_vec = c_ref[1:2, :]
        m_x = c_ref[2:3, :]
        m_y = c_ref[3:4, :]
        m_b1 = c_ref[4:5, :]
        m_b2 = c_ref[5:6, :]
        m_sc = c_ref[6:7, :]

        # per-row grid coords, generated in-kernel (row = b*ny*nx + y*nx + x);
        # exact for per-level rows < 2^24 (asserted in the wrapper).
        row0 = meta_ref[4 * i + 1]
        nx = meta_ref[4 * i + 2]
        ny = meta_ref[4 * i + 3]
        rowi = jax.lax.broadcasted_iota(jnp.int32, (tile_rows, 1), 0) + row0
        rowf = rowi.astype(jnp.float32)
        nxf = jnp.broadcast_to(nx, (tile_rows, 1)).astype(jnp.float32)
        nyf = jnp.broadcast_to(ny, (tile_rows, 1)).astype(jnp.float32)
        col = jnp.floor(rowf / nxf)
        gx = rowf - col * nxf                    # grid x  (tile_rows, 1)
        gy = col - jnp.floor(col / nyf) * nyf    # grid y

        # full-width decode; precomputed per-lane masks pick surviving terms
        grid_term = gx * m_x + gy * m_y          # nonzero only at r in {0,1}
        y2 = y * 2.0                             # shared by xy and wh paths
        xy = (y2 - 0.5 + grid_term) * stride_vec # valid at r in {0,1}
        wh = (y2 * y2) * anchor_vec              # valid at r in {2,3}
        # lane rolls ride the XLU slot; wrapped lanes land only in score /
        # padding lanes, which the masks below zero out (requires no >= 5).
        x1y1 = xy - 0.5 * pltpu.roll(wh, shift=cout_pad - 2, axis=1)
        x2y2 = pltpu.roll(xy, shift=2, axis=1) + 0.5 * wh
        pred_ref[...] = m_b1 * x1y1 + m_b2 * x2y2 + m_sc * y

    return kernel


def fused_detect_pallas(meta, x_all, w_stack, b_stack, const_tbl, *,
                        tile_rows, cout_pad, with_raw):
    """One pallas_call covering the row tiles of all levels in a cin-group."""
    num_tiles = meta.shape[0] // 4
    r_total, cin = x_all.shape
    nl = w_stack.shape[0]
    kernel = _make_detect_kernel(tile_rows, cout_pad, with_raw)

    out_struct = jax.ShapeDtypeStruct((r_total, cout_pad), jnp.float32)
    tile_spec = lambda: pl.BlockSpec((tile_rows, cout_pad), lambda i, m: (i, 0))
    if with_raw:
        out_specs = (tile_spec(), tile_spec())
        out_shape = (out_struct, out_struct)
        n_out = 2
    else:
        out_specs = tile_spec()
        out_shape = out_struct
        n_out = 1

    grid_spec = pltpu.PrefetchScalarGridSpec(
        num_scalar_prefetch=1,
        grid=(num_tiles,),
        in_specs=[
            pl.BlockSpec((tile_rows, cin), lambda i, m: (i, 0)),
            pl.BlockSpec((None, cin, cout_pad), lambda i, m: (m[4 * i], 0, 0)),
            pl.BlockSpec((None, 1, cout_pad), lambda i, m: (m[4 * i], 0, 0)),
            pl.BlockSpec((None, 8, cout_pad), lambda i, m: (m[4 * i], 0, 0)),
        ],
        out_specs=out_specs,
    )

    # advisory cost hint for XLA scheduling around the custom call
    cost = pl.CostEstimate(
        flops=2 * r_total * cin * cout_pad,
        transcendentals=r_total * cout_pad,
        bytes_accessed=(r_total * cin * 2 + nl * cin * cout_pad * 2
                        + nl * 9 * cout_pad * 4
                        + n_out * r_total * cout_pad * 4),
    )

    # explicit VMEM budget: double-buffered x tile + level params + outputs
    vmem_need = 2 * (tile_rows * cin * 2 + cin * cout_pad * 2
                     + 9 * cout_pad * 4 + n_out * tile_rows * cout_pad * 4)
    vmem_limit = min(64 * 1024 * 1024,
                     max(16 * 1024 * 1024, vmem_need * 3 // 2))

    return pl.pallas_call(
        kernel,
        grid_spec=grid_spec,
        out_shape=out_shape,
        compiler_params=pltpu.CompilerParams(
            dimension_semantics=("parallel",),
            vmem_limit_bytes=vmem_limit),
        cost_estimate=cost,
    )(meta, x_all, w_stack, b_stack, const_tbl)


# ----------------------------------------------------------------------------
# "Model" wrapper: backbone stand-in (glue) + fused Detect head.
# ----------------------------------------------------------------------------
def make_features(x, grid_sizes, proj):
    """Backbone stand-in: avg-pool NCHW input to each level + 1x1 projection.
    Emits NHWC so the Detect-head row matrix is a pure reshape (no transpose
    HBM pass before the kernel)."""
    bs, c, h, w = x.shape
    feats = []
    for g in grid_sizes:
        s = h // g
        f = x.reshape(bs, c, g, s, g, s).mean(axis=(3, 5))   # (bs, c, g, g)
        f = jnp.einsum('bchw,dc->bhwd', f, proj)             # NHWC
        feats.append(f)
    return feats


def build_params(key, c_feat, nc, anchors, strides):
    """Deterministic init (mimics Detect.__init__ + _initialize_biases)."""
    na = len(anchors[0]) // 2
    no = nc + 5
    weights, biases = [], []
    for s in strides:
        key, sub = jax.random.split(key)
        w = 0.1 * jax.random.normal(sub, (na * no, c_feat), dtype=jnp.float32)
        b = jnp.zeros((na, no), dtype=jnp.float32)
        b = b.at[:, 4].add(math.log(8.0 / (640.0 / s) ** 2))
        b = b.at[:, 5:].add(math.log(0.6 / (nc - 0.99)))
        weights.append(w)
        biases.append(b.reshape(-1))
    return weights, biases


def model_forward(x, weights, biases, anchors, strides, nc, grid_sizes, proj,
                  tile_rows=2048, export=False):
    """Inference-mode forward of Model:
       export=False -> (cat(preds, axis=1), list of permuted raw head outputs)
       export=True  -> cat(preds, axis=1) only (raw output stream skipped)."""
    na = len(anchors[0]) // 2
    no = nc + 5
    assert no >= 5, "lane-roll decode assumes box lanes r<4 exist per anchor"
    cout = na * no
    cout_pad = _round_up(cout, 128)            # lane-dense outputs

    feats = make_features(x, grid_sizes, proj)
    nl = len(feats)

    # shared per-lane masks (r = channel index within an anchor block)
    lane = jnp.arange(cout_pad)
    r = lane % no
    valid = lane < cout
    m_x = ((r == 0) & valid).astype(jnp.float32)
    m_y = ((r == 1) & valid).astype(jnp.float32)
    m_b1 = ((r < 2) & valid).astype(jnp.float32)
    m_b2 = ((r >= 2) & (r < 4) & valid).astype(jnp.float32)
    m_sc = ((r >= 4) & valid).astype(jnp.float32)
    a_idx = jnp.clip(lane // no, 0, na - 1)
    zrow = jnp.zeros((cout_pad,), jnp.float32)

    # group levels by their true input width so no level pays zero-padded
    # MXU K work (real YOLO heads have different cin per level).
    groups = {}
    for l in range(nl):
        groups.setdefault(int(feats[l].shape[-1]), []).append(l)

    pred_lvl = [None] * nl
    raw_lvl = [None] * nl
    for cin, lvls in groups.items():
        # clamp the row tile to the group's largest level so tiny configs
        # don't over-pad; realistic shapes keep 1024-2048 rows per grid step.
        max_rows = max(feats[l].shape[0] * feats[l].shape[1] * feats[l].shape[2]
                       for l in lvls)
        t_rows = max(16, min(tile_rows, _round_up(max_rows, 16)))

        # stacked, cout-padded per-level parameters (bf16 weights for the MXU)
        w_list, b_list, c_list = [], [], []
        for l in lvls:
            w_list.append(jnp.pad(weights[l].T.astype(jnp.bfloat16),
                                  ((0, 0), (0, cout_pad - cout))))
            b_list.append(jnp.pad(biases[l], (0, cout_pad - cout))[None, :])
            anc = jnp.asarray(anchors[l], jnp.float32).reshape(na, 2)
            anchor_vec = jnp.where(
                (r == 2) & valid, anc[a_idx, 0],
                jnp.where((r == 3) & valid, anc[a_idx, 1], 0.0))
            stride_vec = jnp.full((cout_pad,), float(strides[l]), jnp.float32)
            c_list.append(jnp.stack([stride_vec, anchor_vec, m_x, m_y,
                                     m_b1, m_b2, m_sc, zrow], axis=0))
        w_stack = jnp.stack(w_list)
        b_stack = jnp.stack(b_list).astype(jnp.float32)
        const_tbl = jnp.stack(c_list).astype(jnp.float32)

        # concat per-level row blocks (rows = (b, y, x)), padded to tile mults
        x_blocks, meta, spans = [], [], []
        off = 0
        for gi, l in enumerate(lvls):
            bs, ny, nx, c = feats[l].shape
            rows = bs * ny * nx
            assert rows < (1 << 24), "f32 grid decode needs per-level rows < 2^24"
            n_tiles = pl.cdiv(rows, t_rows)
            rows_pad = n_tiles * t_rows
            x_mat = feats[l].reshape(rows, c).astype(jnp.bfloat16)
            x_mat = jnp.pad(x_mat, ((0, rows_pad - rows), (0, 0)))
            x_blocks.append(x_mat)
            spans.append((l, off, rows, bs, ny, nx))
            for t in range(n_tiles):
                meta.extend([gi, t * t_rows, nx, ny])
            off += rows_pad
        x_all = jnp.concatenate(x_blocks, axis=0)
        meta = jnp.asarray(meta, dtype=jnp.int32)      # flat 1D SMEM table

        outs = fused_detect_pallas(meta, x_all, w_stack, b_stack, const_tbl,
                                   tile_rows=t_rows, cout_pad=cout_pad,
                                   with_raw=not export)
        raw_all, pred_all = (outs if not export else (None, outs))

        for (l, o, rows, bs, ny, nx) in spans:
            pred = pred_all[o:o + rows, :cout]
            # (bs*ny*nx, na*no) -> (bs, na, ny, nx, no)  (matches x[i] layout)
            pred5 = pred.reshape(bs, ny, nx, na, no).transpose(0, 3, 1, 2, 4)
            pred_lvl[l] = pred5.reshape(bs, na * ny * nx, no)
            if not export:
                raw = raw_all[o:o + rows, :cout]
                raw_lvl[l] = raw.reshape(bs, ny, nx, na, no).transpose(0, 3, 1, 2, 4)

    preds = jnp.concatenate(pred_lvl, axis=1)
    if export:
        return preds
    return preds, raw_lvl


# ----------------------------------------------------------------------------
# Pure-JAX reference of the Detect head (for correctness checking).
# ----------------------------------------------------------------------------
def model_forward_ref(x, weights, biases, anchors, strides, nc, grid_sizes, proj):
    na = len(anchors[0]) // 2
    no = nc + 5
    feats = make_features(x, grid_sizes, proj)
    preds, xs = [], []
    for i, f in enumerate(feats):
        bs, ny, nx, c = f.shape
        z = jnp.einsum('bhwc,oc->bhwo', f.astype(jnp.bfloat16),
                       weights[i].astype(jnp.bfloat16),
                       preferred_element_type=jnp.float32)
        z = z + biases[i][None, None, None, :]
        z = z.reshape(bs, ny, nx, na, no).transpose(0, 3, 1, 2, 4)
        xs.append(z)
        y = jax.nn.sigmoid(z)
        xv, yv = jnp.meshgrid(jnp.arange(nx), jnp.arange(ny))
        g = jnp.stack([xv, yv], -1).astype(jnp.float32)[None, None]
        anc = jnp.asarray(anchors[i], jnp.float32).reshape(1, na, 1, 1, 2)
        t0 = (y[..., 0:2] * 2.0 - 0.5 + g) * strides[i]
        t1 = (y[..., 2:4] * 2.0) ** 2 * anc
        box = jnp.concatenate([t0 - t1 / 2, t0 + t1 / 2], -1).reshape(bs, -1, 4)
        score = y[..., 4:].reshape(bs, -1, nc + 1)
        preds.append(jnp.concatenate([box, score], -1))
    return jnp.concatenate(preds, 1), xs


if __name__ == "__main__":
    key = jax.random.PRNGKey(0)

    # Small synthetic config
    bs, c_in, H = 2, 4, 32                      # NCHW input
    c_feat = 32                                 # Detect-head input channels
    nc = 3                                      # number of classes
    anchors = [[10, 13, 16, 30, 33, 23],
               [30, 61, 62, 45, 59, 119],
               [116, 90, 156, 198, 373, 326]]   # 3 levels, 3 anchors each
    grid_sizes = [8, 4, 2]                      # ny == nx per level
    strides = [H // g for g in grid_sizes]      # like Model.__init__ (s / ny)

    key, kx, kp = jax.random.split(key, 3)
    x = jax.random.normal(kx, (bs, c_in, H, H), dtype=jnp.float32)
    proj = jax.random.normal(kp, (c_feat, c_in), dtype=jnp.float32) / math.sqrt(c_in)

    weights, biases = build_params(key, c_feat, nc, anchors, strides)

    # full inference output (preds + permuted raw head outputs)
    preds, xs = model_forward(x, weights, biases, anchors, strides, nc,
                              grid_sizes, proj)
    preds = jax.block_until_ready(preds)
    xs = [jax.block_until_ready(t) for t in xs]

    # export path (preds only; raw output stream skipped inside the kernel)
    preds_exp = model_forward(x, weights, biases, anchors, strides, nc,
                              grid_sizes, proj, export=True)
    preds_exp = jax.block_until_ready(preds_exp)

    # Correctness check vs. pure-JAX reference
    preds_ref, xs_ref = model_forward_ref(x, weights, biases, anchors, strides,
                                          nc, grid_sizes, proj)
    assert preds.shape == preds_ref.shape
    assert jnp.allclose(preds, preds_ref, atol=2e-3, rtol=2e-3), \
        float(jnp.max(jnp.abs(preds - preds_ref)))
    assert jnp.allclose(preds_exp, preds_ref, atol=2e-3, rtol=2e-3)
    for a, b in zip(xs, xs_ref):
        assert a.shape == b.shape
        assert jnp.allclose(a, b, atol=2e-3, rtol=2e-3)

    print("KERNEL_OK")
</pallas_src>

<mosaic_0001>
module attributes {stable_mosaic.version = 11 : i64} {
  func.func @kernel(%arg0: i32, %arg1: memref<12xi32, #tpu.memory_space<smem>>, %arg2: memref<128x32xbf16, #tpu.memory_space<vmem>>, %arg3: memref<1x32x128xbf16, #tpu.memory_space<vmem>>, %arg4: memref<1x1x128xf32, #tpu.memory_space<vmem>>, %arg5: memref<1x8x128xf32, #tpu.memory_space<vmem>>, %arg6: memref<128x128xf32, #tpu.memory_space<vmem>>, %arg7: memref<128x128xf32, #tpu.memory_space<vmem>>) attributes {dimension_semantics = [#tpu.dimension_semantics<parallel>], iteration_bounds = array<i64: 3>, scalar_prefetch = 1 : i64, scratch_operands = 0 : i64, tpu.core_type = #tpu.core_type<tc>, window_params = [{transform_indices = @transform_0, window_bounds = array<i64: 128, 32>}, {transform_indices = @transform_1, window_bounds = array<i64: 1, 32, 128>}, {transform_indices = @transform_2, window_bounds = array<i64: 1, 1, 128>}, {transform_indices = @transform_3, window_bounds = array<i64: 1, 8, 128>}, {transform_indices = @transform_4, window_bounds = array<i64: 128, 128>}, {transform_indices = @transform_5, window_bounds = array<i64: 128, 128>}]} {
    %c0 = arith.constant 0 : index
    %c0_0 = arith.constant 0 : index
    %0 = vector.load %arg2[%c0, %c0_0] : memref<128x32xbf16, #tpu.memory_space<vmem>>, vector<128x32xbf16>
    %c0_1 = arith.constant 0 : index
    %c0_2 = arith.constant 0 : index
    %c0_3 = arith.constant 0 : index
    %1 = vector.load %arg3[%c0_1, %c0_2, %c0_3] : memref<1x32x128xbf16, #tpu.memory_space<vmem>>, vector<1x32x128xbf16>
    %2 = vector.shape_cast %1 : vector<1x32x128xbf16> to vector<32x128xbf16>
    %cst = arith.constant dense<0.000000e+00> : vector<128x128xf32>
    %3 = tpu.matmul %0, %2, %cst {dimension_numbers = #tpu.dot_dimension_numbers<[1], [0], [0], [1], [0, 0, 1, 1], [], []>} : vector<128x32xbf16>, vector<32x128xbf16>, vector<128x128xf32> -> vector<128x128xf32>
    %c0_4 = arith.constant 0 : index
    %c0_5 = arith.constant 0 : index
    %c0_6 = arith.constant 0 : index
    %4 = vector.load %arg4[%c0_4, %c0_5, %c0_6] : memref<1x1x128xf32, #tpu.memory_space<vmem>>, vector<1x1x128xf32>
    %5 = vector.shape_cast %4 : vector<1x1x128xf32> to vector<1x128xf32>
    %6 = vector.broadcast %5 : vector<1x128xf32> to vector<128x128xf32>
    %7 = arith.addf %3, %6 : vector<128x128xf32>
    %c0_7 = arith.constant 0 : index
    %c0_8 = arith.constant 0 : index
    %8 = vector.load %arg6[%c0_7, %c0_8] : memref<128x128xf32, #tpu.memory_space<vmem>>, vector<128x128xf32>
    tpu.vector_store %arg6[%c0_7, %c0_8], %7 {strides = array<i32>} : memref<128x128xf32, #tpu.memory_space<vmem>>, vector<128x128xf32>,
    %9 = arith.negf %7 : vector<128x128xf32>
    %10 = math.exp %9 : vector<128x128xf32>
    %cst_9 = arith.constant 1.000000e+00 : f32
    %11 = vector.broadcast %cst_9 : f32 to vector<128x128xf32>
    %12 = arith.addf %11, %10 : vector<128x128xf32>
    %13 = arith.divf %11, %12 : vector<128x128xf32>
    %c0_10 = arith.constant 0 : index
    %c0_11 = arith.constant 0 : index
    %c0_12 = arith.constant 0 : index
    %14 = vector.load %arg5[%c0_10, %c0_11, %c0_12] : memref<1x8x128xf32, #tpu.memory_space<vmem>>, vector<1x1x128xf32>
    %15 = vector.shape_cast %14 : vector<1x1x128xf32> to vector<1x128xf32>
    %c0_13 = arith.constant 0 : index
    %c1 = arith.constant 1 : index
    %c0_14 = arith.constant 0 : index
    %16 = vector.load %arg5[%c0_13, %c1, %c0_14] : memref<1x8x128xf32, #tpu.memory_space<vmem>>, vector<1x1x128xf32>
    %17 = vector.shape_cast %16 : vector<1x1x128xf32> to vector<1x128xf32>
    %c0_15 = arith.constant 0 : index
    %c2 = arith.constant 2 : index
    %c0_16 = arith.constant 0 : index
    %18 = vector.load %arg5[%c0_15, %c2, %c0_16] : memref<1x8x128xf32, #tpu.memory_space<vmem>>, vector<1x1x128xf32>
    %19 = vector.shape_cast %18 : vector<1x1x128xf32> to vector<1x128xf32>
    %c0_17 = arith.constant 0 : index
    %c3 = arith.constant 3 : index
    %c0_18 = arith.constant 0 : index
    %20 = vector.load %arg5[%c0_17, %c3, %c0_18] : memref<1x8x128xf32, #tpu.memory_space<vmem>>, vector<1x1x128xf32>
    %21 = vector.shape_cast %20 : vector<1x1x128xf32> to vector<1x128xf32>
    %c0_19 = arith.constant 0 : index
    %c4 = arith.constant 4 : index
    %c0_20 = arith.constant 0 : index
    %22 = vector.load %arg5[%c0_19, %c4, %c0_20] : memref<1x8x128xf32, #tpu.memory_space<vmem>>, vector<1x1x128xf32>
    %23 = vector.shape_cast %22 : vector<1x1x128xf32> to vector<1x128xf32>
    %c0_21 = arith.constant 0 : index
    %c5 = arith.constant 5 : index
    %c0_22 = arith.constant 0 : index
    %24 = vector.load %arg5[%c0_21, %c5, %c0_22] : memref<1x8x128xf32, #tpu.memory_space<vmem>>, vector<1x1x128xf32>
    %25 = vector.shape_cast %24 : vector<1x1x128xf32> to vector<1x128xf32>
    %c0_23 = arith.constant 0 : index
    %c6 = arith.constant 6 : index
    %c0_24 = arith.constant 0 : index
    %26 = vector.load %arg5[%c0_23, %c6, %c0_24] : memref<1x8x128xf32, #tpu.memory_space<vmem>>, vector<1x1x128xf32>
    %27 = vector.shape_cast %26 : vector<1x1x128xf32> to vector<1x128xf32>
    %c4_i32 = arith.constant 4 : i32
    %28 = arith.muli %c4_i32, %arg0 : i32
    %c1_i32 = arith.constant 1 : i32
    %29 = arith.addi %28, %c1_i32 : i32
    %30 = arith.index_cast %29 : i32 to index
    %31 = memref.load %arg1[%30] : memref<12xi32, #tpu.memory_space<smem>>
    %c4_i32_25 = arith.constant 4 : i32
    %32 = arith.muli %c4_i32_25, %arg0 : i32
    %c2_i32 = arith.constant 2 : i32
    %33 = arith.addi %32, %c2_i32 : i32
    %34 = arith.index_cast %33 : i32 to index
    %35 = memref.load %arg1[%34] : memref<12xi32, #tpu.memory_space<smem>>
    %c4_i32_26 = arith.constant 4 : i32
    %36 = arith.muli %c4_i32_26, %arg0 : i32
    %c3_i32 = arith.constant 3 : i32
    %37 = arith.addi %36, %c3_i32 : i32
    %38 = arith.index_cast %37 : i32 to index
    %39 = memref.load %arg1[%38] : memref<12xi32, #tpu.memory_space<smem>>
    %40 = tpu.iota {dimensions = array<i32: 0>} : vector<128x1xi32>
    %41 = vector.broadcast %31 : i32 to vector<128x1xi32>
    %42 = arith.addi %40, %41 : vector<128x1xi32>
    %43 = arith.sitofp %42 : vector<128x1xi32> to vector<128x1xf32>
    %44 = vector.broadcast %35 : i32 to vector<128x1xi32>
    %45 = arith.sitofp %44 : vector<128x1xi32> to vector<128x1xf32>
    %46 = vector.broadcast %39 : i32 to vector<128x1xi32>
    %47 = arith.sitofp %46 : vector<128x1xi32> to vector<128x1xf32>
    %48 = arith.divf %43, %45 : vector<128x1xf32>
    %49 = math.floor %48 : vector<128x1xf32>
    %50 = arith.mulf %49, %45 : vector<128x1xf32>
    %51 = arith.subf %43, %50 : vector<128x1xf32>
    %52 = arith.divf %49, %47 : vector<128x1xf32>
    %53 = math.floor %52 : vector<128x1xf32>
    %54 = arith.mulf %53, %47 : vector<128x1xf32>
    %55 = arith.subf %49, %54 : vector<128x1xf32>
    %56 = vector.broadcast %51 : vector<128x1xf32> to vector<128x128xf32>
    %57 = vector.broadcast %19 : vector<1x128xf32> to vector<128x128xf32>
    %58 = arith.mulf %56, %57 : vector<128x128xf32>
    %59 = vector.broadcast %55 : vector<128x1xf32> to vector<128x128xf32>
    %60 = vector.broadcast %21 : vector<1x128xf32> to vector<128x128xf32>
    %61 = arith.mulf %59, %60 : vector<128x128xf32>
    %62 = arith.addf %58, %61 : vector<128x128xf32>
    %cst_27 = arith.constant 2.000000e+00 : f32
    %63 = vector.broadcast %cst_27 : f32 to vector<128x128xf32>
    %64 = arith.mulf %13, %63 : vector<128x128xf32>
    %cst_28 = arith.constant 5.000000e-01 : f32
    %65 = vector.broadcast %cst_28 : f32 to vector<128x128xf32>
    %66 = arith.subf %64, %65 : vector<128x128xf32>
    %67 = arith.addf %66, %62 : vector<128x128xf32>
    %68 = vector.broadcast %15 : vector<1x128xf32> to vector<128x128xf32>
    %69 = arith.mulf %67, %68 : vector<128x128xf32>
    %70 = arith.mulf %64, %64 : vector<128x128xf32>
    %71 = vector.broadcast %17 : vector<1x128xf32> to vector<128x128xf32>
    %72 = arith.mulf %70, %71 : vector<128x128xf32>
    %c126_i32 = arith.constant 126 : i32
    %73 = tpu.dynamic_rotate %72 by %c126_i32 dim 1 : vector<128x128xf32>, i32 -> vector<128x128xf32>
    %cst_29 = arith.constant 5.000000e-01 : f32
    %74 = vector.broadcast %cst_29 : f32 to vector<128x128xf32>
    %75 = arith.mulf %74, %73 : vector<128x128xf32>
    %76 = arith.subf %69, %75 : vector<128x128xf32>
    %c2_i32_30 = arith.constant 2 : i32
    %77 = tpu.dynamic_rotate %69 by %c2_i32_30 dim 1 : vector<128x128xf32>, i32 -> vector<128x128xf32>
    %cst_31 = arith.constant 5.000000e-01 : f32
    %78 = vector.broadcast %cst_31 : f32 to vector<128x128xf32>
    %79 = arith.mulf %78, %72 : vector<128x128xf32>
    %80 = arith.addf %77, %79 : vector<128x128xf32>
    %81 = vector.broadcast %23 : vector<1x128xf32> to vector<128x128xf32>
    %82 = arith.mulf %81, %76 : vector<128x128xf32>
    %83 = vector.broadcast %25 : vector<1x128xf32> to vector<128x128xf32>
    %84 = arith.mulf %83, %80 : vector<128x128xf32>
    %85 = arith.addf %82, %84 : vector<128x128xf32>
    %86 = vector.broadcast %27 : vector<1x128xf32> to vector<128x128xf32>
    %87 = arith.mulf %86, %13 : vector<128x128xf32>
    %88 = arith.addf %85, %87 : vector<128x128xf32>
    %c0_32 = arith.constant 0 : index
    %c0_33 = arith.constant 0 : index
    %89 = vector.load %arg7[%c0_32, %c0_33] : memref<128x128xf32, #tpu.memory_space<vmem>>, vector<128x128xf32>
    tpu.vector_store %arg7[%c0_32, %c0_33], %88 {strides = array<i32>} : memref<128x128xf32, #tpu.memory_space<vmem>>, vector<128x128xf32>,
    return
  }
  func.func @transform_0(%arg0: i32, %arg1: memref<12xi32, #tpu.memory_space<smem>>) -> (i32, i32) {
    %c0_i32 = arith.constant 0 : i32
    %c0_i32_0 = arith.constant 0 : i32
    return %arg0, %c0_i32 : i32, i32
  }
  func.func @transform_1(%arg0: i32, %arg1: memref<12xi32, #tpu.memory_space<smem>>) -> (i32, i32, i32) {
    %c4_i32 = arith.constant 4 : i32
    %0 = arith.muli %c4_i32, %arg0 : i32
    %1 = arith.index_cast %0 : i32 to index
    %2 = memref.load %arg1[%1] : memref<12xi32, #tpu.memory_space<smem>>
    %c0_i32 = arith.constant 0 : i32
    %c0_i32_0 = arith.constant 0 : i32
    %c0_i32_1 = arith.constant 0 : i32
    return %2, %c0_i32, %c0_i32_0 : i32, i32, i32
  }
  func.func @transform_2(%arg0: i32, %arg1: memref<12xi32, #tpu.memory_space<smem>>) -> (i32, i32, i32) {
    %c4_i32 = arith.constant 4 : i32
    %0 = arith.muli %c4_i32, %arg0 : i32
    %1 = arith.index_cast %0 : i32 to index
    %2 = memref.load %arg1[%1] : memref<12xi32, #tpu.memory_space<smem>>
    %c0_i32 = arith.constant 0 : i32
    %c0_i32_0 = arith.constant 0 : i32
    %c0_i32_1 = arith.constant 0 : i32
    return %2, %c0_i32, %c0_i32_0 : i32, i32, i32
  }
  func.func @transform_3(%arg0: i32, %arg1: memref<12xi32, #tpu.memory_space<smem>>) -> (i32, i32, i32) {
    %c4_i32 = arith.constant 4 : i32
    %0 = arith.muli %c4_i32, %arg0 : i32
    %1 = arith.index_cast %0 : i32 to index
    %2 = memref.load %arg1[%1] : memref<12xi32, #tpu.memory_space<smem>>
    %c0_i32 = arith.constant 0 : i32
    %c0_i32_0 = arith.constant 0 : i32
    %c0_i32_1 = arith.constant 0 : i32
    return %2, %c0_i32, %c0_i32_0 : i32, i32, i32
  }
  func.func @transform_4(%arg0: i32, %arg1: memref<12xi32, #tpu.memory_space<smem>>) -> (i32, i32) {
    %c0_i32 = arith.constant 0 : i32
    %c0_i32_0 = arith.constant 0 : i32
    return %arg0, %c0_i32 : i32, i32
  }
  func.func @transform_5(%arg0: i32, %arg1: memref<12xi32, #tpu.memory_space<smem>>) -> (i32, i32) {
    %c0_i32 = arith.constant 0 : i32
    %c0_i32_0 = arith.constant 0 : i32
    return %arg0, %c0_i32 : i32, i32
  }
}

</mosaic_0001>

<llo_original>
// kernel: tpu_custom_call.1
$region0: #{tpu_custom_call.1}
  #allocation0 [shape = 'u32[]', space=smem, size = 0x4, offset = 0x4, fixed_abs, tag = 'smem constant byte address 0x4 - core index']
  #allocation1 [shape = 'u32[144,128]{1,0:T(1,128)}', space=vmem, size = 0x12000, scoped, tag = 'internal scratch']
  #allocation2 [shape = 's32[1]{0}', space=sflag, size = 0x4, scoped, tag = 'scoped memory for tpu_custom_call.1']
  #allocation3 [shape = 'u8[512]{0}', space=smem, size = 0x200, scoped, tag = 'prefetched SMEM operand 0']
  %s0 = inlined_call_operand.vmem [shape: s32[12], index: 0, kind: input, shape index: {}]
  %s1 = inlined_call_operand.vmem [shape: bf16[384,32], index: 1, kind: input, shape index: {}]
  %s2 = inlined_call_operand.vmem [shape: bf16[3,32,128], index: 2, kind: input, shape index: {}]
  %s3 = inlined_call_operand.vmem [shape: f32[3,1,128], index: 3, kind: input, shape index: {}]
  %s4 = inlined_call_operand.vmem [shape: f32[3,8,128], index: 4, kind: input, shape index: {}]
  %s5 = inlined_call_operand.hbm [shape: f32[384,128], index: 5, kind: output, shape index: {0}]
  %s6 = inlined_call_operand.hbm [shape: f32[384,128], index: 6, kind: output, shape index: {1}]
  %7 = xla_tuple %s5, %s6
  %s8 = sld [smem:[#allocation0]]
  $region57: #{tpu_custom_call.1} parent=0
    _
  %s10 = ssub.s32 1, %s8
  %s11 = scalar_select 0, %s10, %s8
  %s12 = sshll.u32 %s0, 4
  %s13 = int_to_ptr.vmem [resolvable:$true] %s12
  %15 = dma.vmem_to_smem %s13, 16, [#allocation3], [#allocation2]
  %16 = dma.done [#allocation2], 16
  %17 = sfence
  $region1: #{tpu_custom_call.1} parent=0
    #allocation4 [shape = 'u8[131072]{0}', space=vmem, size = 0x20000, scoped, tag = 'output window, operand 0']
    #allocation5 [shape = 's32[2]{0}', space=sflag, size = 0x8, scoped, tag = 'scoped memory for tpu_custom_call.1']
    #allocation6 [shape = 'u8[131072]{0}', space=vmem, size = 0x20000, scoped, tag = 'output window, operand 1']
    #allocation7 [shape = 's32[2]{0}', space=sflag, size = 0x8, scoped, tag = 'scoped memory for tpu_custom_call.1']
    %18 = vsyncpa [#allocation5], 0
    %s19 = scalar_lea.sflag [#allocation5], 1
    %20 = vsyncpa %s19, 0
    %21 = vsyncpa [#allocation7], 0
    %s22 = scalar_lea.sflag [#allocation7], 1
    %23 = vsyncpa %s22, 0
    loop: start=0, step=1, limit=5
    $region2: #{tpu_custom_call.1} parent=1 // loop_pre_header
      _
    $region3: #{tpu_custom_call.1} parent=1 // loop_header
      %s25 = sphi 0, %s29
      %p26 = scmp.ge.s32.totalorder %s25, 5
      %s35 = sphi 0, %s37
      %s38 = sphi 0, %s35
      %s39 = sphi 0, %s38
      %s55 = sphi 0, %s39
      %s65 = sphi 0, %s67
      %s68 = sphi 0, %s65
      %s69 = sphi 0, %s68
      %s85 = sphi 0, %s69
      %s95 = sphi 0, %s97
      %s98 = sphi 0, %s95
      %s99 = sphi 0, %s98
      %s115 = sphi 0, %s99
      %s125 = sphi 0, %s127
      %s128 = sphi 0, %s125
      %s129 = sphi 0, %s128
      %s145 = sphi 0, %s129
      %s151 = sphi 0, %s153
      %s154 = sphi 0, %s151
      %s155 = sphi 0, %s154
      %s171 = sphi 0, %s155
      %s177 = sphi 0, %s179
      %s180 = sphi 0, %s177
      %s181 = sphi 0, %s180
      %s197 = sphi 0, %s181
    $region4: #{tpu_custom_call.1} parent=1 // loop_header_branch
      %28 = sbr.rel (%p26) target = $region8
    $region5: #{tpu_custom_call.1} parent=1 // loop_body
      %s30 = ssub.s32 %s25, 1
      %s31 = ssub.s32 %s25, 2
      %s32 = sadd.s32 %s25, 1
      %s33 = ssub.s32 %s25, %s32
      %p34 = scmp.eq.s32.totalorder %s33, 0
      %s36 = sadd.s32 %s35, 1
      %s37 = scalar_select %p34, %s35, %s36
      %p40 = pneg %p34
      %p41 = scmp.eq.s32.totalorder %s25, 2
      %p42 = por %p40, %p41
      %p43 = scmp.ne.s32.totalorder %s35, %s38
      %p44 = scmp.eq.s32.totalorder %s25, 0
      %p45 = por %p43, %p44
      %p46 = scmp.ne.s32.totalorder %s35, %s38
      %p47 = scmp.eq.s32.totalorder %s30, 2
      %p48 = por %p46, %p47
      %p49 = scmp.ne.s32.totalorder %s38, %s39
      %p50 = scmp.eq.s32.totalorder %s30, 0
      %p51 = por %p49, %p50
      %p52 = scmp.ne.s32.totalorder %s38, %s39
      %p53 = scmp.eq.s32.totalorder %s31, 2
      %p54 = por %p52, %p53
      %p56 = scmp.ne.s32.totalorder %s39, %s55
      %p57 = scmp.eq.s32.totalorder %s31, 0
      %p58 = por %p56, %p57
      %s59 = smul.u32 %s25, 4
      %s60 = sld [smem:[#allocation3 + %s59]]
      %s61 = smul.u32 %s32, 4
      %s62 = sld [smem:[#allocation3 + %s61]]
      %s63 = ssub.s32 %s60, %s62
      %p64 = scmp.eq.s32.totalorder %s63, 0
      %s66 = sadd.s32 %s65, 1
      %s67 = scalar_select %p64, %s65, %s66
      %p70 = pneg %p64
      %p71 = scmp.eq.s32.totalorder %s25, 2
      %p72 = por %p70, %p71
      %p73 = scmp.ne.s32.totalorder %s65, %s68
      %p74 = scmp.eq.s32.totalorder %s25, 0
      %p75 = por %p73, %p74
      %p76 = scmp.ne.s32.totalorder %s65, %s68
      %p77 = scmp.eq.s32.totalorder %s30, 2
      %p78 = por %p76, %p77
      %p79 = scmp.ne.s32.totalorder %s68, %s69
      %p80 = scmp.eq.s32.totalorder %s30, 0
      %p81 = por %p79, %p80
      %p82 = scmp.ne.s32.totalorder %s68, %s69
      %p83 = scmp.eq.s32.totalorder %s31, 2
      %p84 = por %p82, %p83
      %p86 = scmp.ne.s32.totalorder %s69, %s85
      %p87 = scmp.eq.s32.totalorder %s31, 0
      %p88 = por %p86, %p87
      %s89 = smul.u32 %s25, 4
      %s90 = sld [smem:[#allocation3 + %s89]]
      %s91 = smul.u32 %s32, 4
      %s92 = sld [smem:[#allocation3 + %s91]]
      %s93 = ssub.s32 %s90, %s92
      %p94 = scmp.eq.s32.totalorder %s93, 0
      %s96 = sadd.s32 %s95, 1
      %s97 = scalar_select %p94, %s95, %s96
      %p100 = pneg %p94
      %p101 = scmp.eq.s32.totalorder %s25, 2
      %p102 = por %p100, %p101
      %p103 = scmp.ne.s32.totalorder %s95, %s98
      %p104 = scmp.eq.s32.totalorder %s25, 0
      %p105 = por %p103, %p104
      %p106 = scmp.ne.s32.totalorder %s95, %s98
      %p107 = scmp.eq.s32.totalorder %s30, 2
      %p108 = por %p106, %p107
      %p109 = scmp.ne.s32.totalorder %s98, %s99
      %p110 = scmp.eq.s32.totalorder %s30, 0
      %p111 = por %p109, %p110
      %p112 = scmp.ne.s32.totalorder %s98, %s99
      %p113 = scmp.eq.s32.totalorder %s31, 2
      %p114 = por %p112, %p113
      %p116 = scmp.ne.s32.totalorder %s99, %s115
      %p117 = scmp.eq.s32.totalorder %s31, 0
      %p118 = por %p116, %p117
      %s119 = smul.u32 %s25, 4
      %s120 = sld [smem:[#allocation3 + %s119]]
      %s121 = smul.u32 %s32, 4
      %s122 = sld [smem:[#allocation3 + %s121]]
      %s123 = ssub.s32 %s120, %s122
      %p124 = scmp.eq.s32.totalorder %s123, 0
      %s126 = sadd.s32 %s125, 1
      %s127 = scalar_select %p124, %s125, %s126
      %p130 = pneg %p124
      %p131 = scmp.eq.s32.totalorder %s25, 2
      %p132 = por %p130, %p131
      %p133 = scmp.ne.s32.totalorder %s125, %s128
      %p134 = scmp.eq.s32.totalorder %s25, 0
      %p135 = por %p133, %p134
      %p136 = scmp.ne.s32.totalorder %s125, %s128
      %p137 = scmp.eq.s32.totalorder %s30, 2
      %p138 = por %p136, %p137
      %p139 = scmp.ne.s32.totalorder %s128, %s129
      %p140 = scmp.eq.s32.totalorder %s30, 0
      %p141 = por %p139, %p140
      %p142 = scmp.ne.s32.totalorder %s128, %s129
      %p143 = scmp.eq.s32.totalorder %s31, 2
      %p144 = por %p142, %p143
      %p146 = scmp.ne.s32.totalorder %s129, %s145
      %p147 = scmp.eq.s32.totalorder %s31, 0
      %p148 = por %p146, %p147
      %s149 = ssub.s32 %s25, %s32
      %p150 = scmp.eq.s32.totalorder %s149, 0
      %s152 = sadd.s32 %s151, 1
      %s153 = scalar_select %p150, %s151, %s152
      %p156 = pneg %p150
      %p157 = scmp.eq.s32.totalorder %s25, 2
      %p158 = por %p156, %p157
      %p159 = scmp.ne.s32.totalorder %s151, %s154
      %p160 = scmp.eq.s32.totalorder %s25, 0
      %p161 = por %p159, %p160
      %p162 = scmp.ne.s32.totalorder %s151, %s154
      %p163 = scmp.eq.s32.totalorder %s30, 2
      %p164 = por %p162, %p163
      %p165 = scmp.ne.s32.totalorder %s154, %s155
      %p166 = scmp.eq.s32.totalorder %s30, 0
      %p167 = por %p165, %p166
      %p168 = scmp.ne.s32.totalorder %s154, %s155
      %p169 = scmp.eq.s32.totalorder %s31, 2
      %p170 = por %p168, %p169
      %p172 = scmp.ne.s32.totalorder %s155, %s171
      %p173 = scmp.eq.s32.totalorder %s31, 0
      %p174 = por %p172, %p173
      %s175 = ssub.s32 %s25, %s32
      %p176 = scmp.eq.s32.totalorder %s175, 0
      %s178 = sadd.s32 %s177, 1
      %s179 = scalar_select %p176, %s177, %s178
      %p182 = pneg %p176
      %p183 = scmp.eq.s32.totalorder %s25, 2
      %p184 = por %p182, %p183
      %p185 = scmp.ne.s32.totalorder %s177, %s180
      %p186 = scmp.eq.s32.totalorder %s25, 0
      %p187 = por %p185, %p186
      %p188 = scmp.ne.s32.totalorder %s177, %s180
      %p189 = scmp.eq.s32.totalorder %s30, 2
      %p190 = por %p188, %p189
      %p191 = scmp.ne.s32.totalorder %s180, %s181
      %p192 = scmp.eq.s32.totalorder %s30, 0
      %p193 = por %p191, %p192
      %p194 = scmp.ne.s32.totalorder %s180, %s181
      %p195 = scmp.eq.s32.totalorder %s31, 2
      %p196 = por %p194, %p195
      %p198 = scmp.ne.s32.totalorder %s181, %s197
      %p199 = scmp.eq.s32.totalorder %s31, 0
      %p200 = por %p198, %p199
      %p201 = scmp.le.s32.totalorder 1, %s25
      %p202 = scmp.lt.s32.totalorder %s25, 4
      %p203 = pnand %p201, %p202
      %p204 = pneg %p203
      // Predicated region
      $region9: #{tpu_custom_call.1} parent=5 // pred_check
        _
      $region10: #{tpu_custom_call.1} parent=5 // pred_check_branch
        %206 = sbr.rel (%p203) target = $region12
      $region11: #{tpu_custom_call.1} parent=5 // pred_region
        %s207 = ssub.s32 %s25, 1
      $region12: #{tpu_custom_call.1} parent=5 // pred_fallthru
        _
      %p208 = scmp.lt.s32.totalorder %s25, 3
      // Predicated region
      $region13: #{tpu_custom_call.1} parent=5 // pred_check
        %p209 = pneg %p208
      $region14: #{tpu_custom_call.1} parent=5 // pred_check_branch
        %211 = sbr.rel (%p209) target = $region16
      $region15: #{tpu_custom_call.1} parent=5 // pred_region
        // Predicated region
        $region17: #{tpu_custom_call.1} parent=15 // pred_check
          %p212 = pneg %p45
        $region18: #{tpu_custom_call.1} parent=15 // pred_check_branch
          %214 = sbr.rel (%p212) target = $region20
        $region19: #{tpu_custom_call.1} parent=15 // pred_region
          %s215 = smul.u32 16, %s25
          %p216 = scmp.lt.s32.totalorder %s215, 47
          %s217 = scalar_select %p216, %s215, 47
          %s218 = smul.addr %s217, 4
          %s219 = scalar_lea.vmem %s1, %s218
          %s220 = smul.u32 16, %s25
        $region20: #{tpu_custom_call.1} parent=15 // pred_fallthru
          _
        // Predicated region
        $region21: #{tpu_custom_call.1} parent=15 // pred_check
          %p221 = pneg %p75
        $region22: #{tpu_custom_call.1} parent=15 // pred_check_branch
          %223 = sbr.rel (%p221) target = $region24
        $region23: #{tpu_custom_call.1} parent=15 // pred_region
          %s224 = smul.u32 %s25, 4
          %s225 = sld [smem:[#allocation3 + %s224]]
          %p226 = scmp.lt.s32.totalorder %s225, 2
          %s227 = scalar_select %p226, %s225, 2
          %s228 = smul.addr %s227, 4
          %s229 = smul.addr %s228, 4
          %s230 = scalar_lea.vmem %s2, %s229
          %s231 = smul.u32 %s25, 4
          %s232 = sld [smem:[#allocation3 + %s231]]
        $region24: #{tpu_custom_call.1} parent=15 // pred_fallthru
          _
        // Predicated region
        $region25: #{tpu_custom_call.1} parent=15 // pred_check
          %p233 = pneg %p105
        $region26: #{tpu_custom_call.1} parent=15 // pred_check_branch
          %235 = sbr.rel (%p233) target = $region28
        $region27: #{tpu_custom_call.1} parent=15 // pred_region
          %s236 = smul.u32 %s25, 4
          %s237 = sld [smem:[#allocation3 + %s236]]
          %p238 = scmp.lt.s32.totalorder %s237, 2
          %s239 = scalar_select %p238, %s237, 2
          %s240 = scalar_lea.vmem %s3, %s239
          %s241 = smul.u32 %s25, 4
          %s242 = sld [smem:[#allocation3 + %s241]]
        $region28: #{tpu_custom_call.1} parent=15 // pred_fallthru
          _
        // Predicated region
        $region29: #{tpu_custom_call.1} parent=15 // pred_check
          %p243 = pneg %p135
        $region30: #{tpu_custom_call.1} parent=15 // pred_check_branch
          %245 = sbr.rel (%p243) target = $region32
        $region31: #{tpu_custom_call.1} parent=15 // pred_region
          %s246 = smul.u32 %s25, 4
          %s247 = sld [smem:[#allocation3 + %s246]]
          %p248 = scmp.lt.s32.totalorder %s247, 2
          %s249 = scalar_select %p248, %s247, 2
          %s250 = smul.addr %s249, 8
          %s251 = scalar_lea.vmem %s4, %s250
          %s252 = smul.u32 %s25, 4
          %s253 = sld [smem:[#allocation3 + %s252]]
        $region32: #{tpu_custom_call.1} parent=15 // pred_fallthru
          _
      $region16: #{tpu_custom_call.1} parent=5 // pred_fallthru
        _
      %p254 = scmp.le.s32.totalorder 1, %s25
      %p255 = scmp.lt.s32.totalorder %s25, 4
      %p256 = pnand %p254, %p255
      %p257 = pneg %p256
      // Predicated region
      $region33: #{tpu_custom_call.1} parent=5 // pred_check
        _
      $region34: #{tpu_custom_call.1} parent=5 // pred_check_branch
        %259 = sbr.rel (%p256) target = $region36
      $region35: #{tpu_custom_call.1} parent=5 // pred_region
        %s260 = ssub.s32 %s25, 1
        %s261 = smul.u32 16, %s30
        %p262 = scmp.lt.s32.totalorder %s261, 47
        %s263 = scalar_select %p262, %s261, 47
        %s264 = smul.addr %s263, 4
        %s265 = scalar_lea.vmem %s1, %s264
        %p266 = pneg %p51
        %p267 = pneg %p48
        %s268 = smul.u32 %s30, 4
        %s269 = sld [smem:[#allocation3 + %s268]]
        %p270 = scmp.lt.s32.totalorder %s269, 2
        %s271 = scalar_select %p270, %s269, 2
        %s272 = smul.addr %s271, 4
        %s273 = smul.addr %s272, 4
        %s274 = scalar_lea.vmem %s2, %s273
        %p275 = pneg %p81
        %p276 = pneg %p78
        %s277 = smul.u32 %s30, 4
        %s278 = sld [smem:[#allocation3 + %s277]]
        %p279 = scmp.lt.s32.totalorder %s278, 2
        %s280 = scalar_select %p279, %s278, 2
        %s281 = scalar_lea.vmem %s3, %s280
        %p282 = pneg %p111
        %p283 = pneg %p108
        %s284 = smul.u32 %s30, 4
        %s285 = sld [smem:[#allocation3 + %s284]]
        %p286 = scmp.lt.s32.totalorder %s285, 2
        %s287 = scalar_select %p286, %s285, 2
        %s288 = smul.addr %s287, 8
        %s289 = scalar_lea.vmem %s4, %s288
        %p290 = pneg %p141
        %p291 = pneg %p138
        %p292 = pneg %p167
        %p293 = pneg %p164
        %s294 = sand.u32 %s154, 1
        %s295 = scalar_lea.sflag [#allocation5], %s294
        %s296 = sand.u32 %s154, 1
        %s297 = smul.addr %s296, 128
        %s298 = scalar_lea.vmem [#allocation4], %s297
        %p299 = pneg %p193
        %p300 = pneg %p190
        %s301 = sand.u32 %s180, 1
        %s302 = scalar_lea.sflag [#allocation7], %s301
        %s303 = sand.u32 %s180, 1
        %s304 = smul.addr %s303, 128
        %s305 = scalar_lea.vmem [#allocation6], %s304
        %s306 = smul.u32 16, %s30
        %p307 = scmp.lt.s32.totalorder %s306, 47
        %s308 = scalar_select %p307, %s306, 47
        %s309 = smul.addr %s308, 4
        %s310 = scalar_lea.vmem %s1, %s309
        %s311 = smul.u32 16, %s30
        %s312 = smul.u32 %s30, 4
        %s313 = sld [smem:[#allocation3 + %s312]]
        %p314 = scmp.lt.s32.totalorder %s313, 2
        %s315 = scalar_select %p314, %s313, 2
        %s316 = smul.addr %s315, 4
        %s317 = smul.addr %s316, 4
        %s318 = scalar_lea.vmem %s2, %s317
        %s319 = smul.u32 %s30, 4
        %s320 = sld [smem:[#allocation3 + %s319]]
        %s321 = smul.u32 %s30, 4
        %s322 = sld [smem:[#allocation3 + %s321]]
        %p323 = scmp.lt.s32.totalorder %s322, 2
        %s324 = scalar_select %p323, %s322, 2
        %s325 = scalar_lea.vmem %s3, %s324
        %s326 = smul.u32 %s30, 4
        %s327 = sld [smem:[#allocation3 + %s326]]
        %s328 = smul.u32 %s30, 4
        %s329 = sld [smem:[#allocation3 + %s328]]
        %p330 = scmp.lt.s32.totalorder %s329, 2
        %s331 = scalar_select %p330, %s329, 2
        %s332 = smul.addr %s331, 8
        %s333 = scalar_lea.vmem %s4, %s332
        %s334 = smul.u32 %s30, 4
        %s335 = sld [smem:[#allocation3 + %s334]]
        %s336 = smul.u32 16, %s30
        %s337 = smul.u32 16, %s30
        %v339 = vld [vmem:[%s310] sm:$0xf]
        %v340 = vld [vmem:[%s310 + $0x4] sm:$0xf]
        %v341 = vld [vmem:[%s310 + $0x8] sm:$0xf]
        %v342 = vld [vmem:[%s310 + $0xc] sm:$0xf]
        %v343 = vld [vmem:[%s310 + $0x10] sm:$0xf]
        %v344 = vld [vmem:[%s310 + $0x14] sm:$0xf]
        %v345 = vld [vmem:[%s310 + $0x18] sm:$0xf]
        %v346 = vld [vmem:[%s310 + $0x1c] sm:$0xf]
        %v347 = vld [vmem:[%s310 + $0x20] sm:$0xf]
        %v348 = vld [vmem:[%s310 + $0x24] sm:$0xf]
        %v349 = vld [vmem:[%s310 + $0x28] sm:$0xf]
        %v350 = vld [vmem:[%s310 + $0x2c] sm:$0xf]
        %v351 = vld [vmem:[%s310 + $0x30] sm:$0xf]
        %v352 = vld [vmem:[%s310 + $0x34] sm:$0xf]
        %v353 = vld [vmem:[%s310 + $0x38] sm:$0xf]
        %v354 = vld [vmem:[%s310 + $0x3c] sm:$0xf]
        %v355 = vld [vmem:[%s318] sm:$0xf]
        %v356 = vld [vmem:[%s318 + $0x4] sm:$0xf]
        %v357 = vld [vmem:[%s318 + $0x8] sm:$0xf]
        %v358 = vld [vmem:[%s318 + $0xc] sm:$0xf]
        %v359 = vld [vmem:[%s325] sm:$0x1]
        %v361 = vlaneseq
        %v362 = vshrl.u32 %v361, 7
        %v363 = vsub.s32 0, %v362
        %v364 = vrot.slane %v359, %v363
        %v382 = vunpack.c.l.b16 %v339
        %v383 = vunpack.c.l.b16 %v340
        %v384 = vunpack.c.l.b16 %v341
        %v385 = vunpack.c.l.b16 %v342
        %v386 = vunpack.c.l.b16 %v343
        %v387 = vunpack.c.l.b16 %v344
        %v388 = vunpack.c.l.b16 %v345
        %v389 = vunpack.c.l.b16 %v346
        %v390 = vunpack.c.l.b16 %v347
        %v391 = vunpack.c.l.b16 %v348
        %v392 = vunpack.c.l.b16 %v349
        %v393 = vunpack.c.l.b16 %v350
        %v394 = vunpack.c.l.b16 %v351
        %v395 = vunpack.c.l.b16 %v352
        %v396 = vunpack.c.l.b16 %v353
        %v397 = vunpack.c.l.b16 %v354
        %v398 = vpack.c.b16 %v383, %v382
        %v399 = vpack.c.b16 %v385, %v384
        %v400 = vpack.c.b16 %v387, %v386
        %v401 = vpack.c.b16 %v389, %v388
        %v402 = vpack.c.b16 %v391, %v390
        %v403 = vpack.c.b16 %v393, %v392
        %v404 = vpack.c.b16 %v395, %v394
        %v405 = vpack.c.b16 %v397, %v396
        %v410 = vunpack.c.l.b16 %v355
        %v411 = vunpack.c.l.b16 %v356
        %v412 = vunpack.c.l.b16 %v357
        %v413 = vunpack.c.l.b16 %v358
        %v414 = vpack.c.b16 %v411, %v410
        %v415 = vpack.c.b16 %v413, %v412
        %vm418 = vcmask 261120
        %v420 = vsel %vm418, %v398, 0
        %v423 = vsel %vm418, %v399, 0
        %v426 = vsel %vm418, %v400, 0
        %v429 = vsel %vm418, %v401, 0
        %v432 = vsel %vm418, %v402, 0
        %v435 = vsel %vm418, %v403, 0
        %v438 = vsel %vm418, %v404, 0
        %v441 = vsel %vm418, %v405, 0
        %443 = vmatprep.subr.bf16.mxu0 0
        %444 = vmatpush1.bf16.msra.mxu0 0
        %445 = vmatprep.subr.bf16.mxu0 0
        %446 = vmatpush1.bf16.msra.mxu0 0
        %447 = vmatprep.subr.bf16.mxu0 0
        %448 = vmatpush1.bf16.msra.mxu0 0
        %449 = vmatprep.subr.bf16.mxu0 0
        %450 = vmatpush1.bf16.msra.mxu0 0
        %451 = vmatprep.subr.bf16.mxu0 0
        %452 = vmatpush1.bf16.msra.mxu0 0
        %453 = vmatprep.subr.bf16.mxu0 0
        %454 = vmatpush1.bf16.msra.mxu0 0
        %455 = vmatprep.subr.bf16.mxu0 0
        %456 = vmatpush1.bf16.msra.mxu0 %v415
        %457 = vmatprep.subr.bf16.mxu0 0
        %458 = vmatpush1.bf16.msra.mxu0 %v414
        %459 = vmatprep.subr.bf16.mxu0 0
        %460 = vmatpush2.bf16.msra.mxu0 0
        %461 = vmatprep.subr.bf16.mxu0 0
        %462 = vmatpush2.bf16.msra.mxu0 0
        %463 = vmatprep.subr.bf16.mxu0 0
        %464 = vmatpush2.bf16.msra.mxu0 0
        %465 = vmatprep.subr.bf16.mxu0 0
        %466 = vmatpush2.bf16.msra.mxu0 0
        %467 = vmatprep.subr.bf16.mxu0 0
        %468 = vmatpush2.bf16.msra.mxu0 0
        %469 = vmatprep.subr.bf16.mxu0 0
        %470 = vmatpush2.bf16.msra.mxu0 0
        %471 = vmatprep.subr.bf16.mxu0 0
        %472 = vmatpush2.bf16.msra.mxu0 0
        %473 = vmatprep.subr.bf16.mxu0 0
        %474 = vmatpush2.bf16.msra.mxu0 0
        %475 = vmatprep.mubr.bf16.mxu0 0
        %476 = vmatmul.mubr.bf16.gmra.mxu0 %v420
        %v477 = vpop.f32.mrf.mxu0
        %v478 = vadd.f32 %v364, %v477
        %v479 = vpop.f32.mrf.mxu0
        %v480 = vpop.f32.mrf.mxu0
        %v481 = vadd.f32 %v364, %v480
        %v482 = vpop.f32.mrf.mxu0
        %483 = vmatprep.mubr.bf16.mxu0 0
        %484 = vmatmul.mubr.bf16.gmra.mxu0 %v423
        %v485 = vpop.f32.mrf.mxu0
        %v486 = vadd.f32 %v364, %v485
        %v487 = vpop.f32.mrf.mxu0
        %v488 = vpop.f32.mrf.mxu0
        %v489 = vadd.f32 %v364, %v488
        %v490 = vpop.f32.mrf.mxu0
        %491 = vmatprep.mubr.bf16.mxu0 0
        %492 = vmatmul.mubr.bf16.gmra.mxu0 %v426
        %v493 = vpop.f32.mrf.mxu0
        %v494 = vadd.f32 %v364, %v493
        %v495 = vpop.f32.mrf.mxu0
        %v496 = vpop.f32.mrf.mxu0
        %v497 = vadd.f32 %v364, %v496
        %v498 = vpop.f32.mrf.mxu0
        %499 = vmatprep.mubr.bf16.mxu0 0
        %500 = vmatmul.mubr.bf16.gmra.mxu0 %v429
        %v501 = vpop.f32.mrf.mxu0
        %v502 = vadd.f32 %v364, %v501
        %v503 = vpop.f32.mrf.mxu0
        %v504 = vpop.f32.mrf.mxu0
        %v505 = vadd.f32 %v364, %v504
        %v506 = vpop.f32.mrf.mxu0
        %507 = vmatprep.mubr.bf16.mxu0 0
        %508 = vmatmul.mubr.bf16.gmra.mxu0 %v432
        %v509 = vpop.f32.mrf.mxu0
        %v510 = vadd.f32 %v364, %v509
        %v511 = vpop.f32.mrf.mxu0
        %v512 = vpop.f32.mrf.mxu0
        %v513 = vadd.f32 %v364, %v512
        %v514 = vpop.f32.mrf.mxu0
        %515 = vmatprep.mubr.bf16.mxu0 0
        %516 = vmatmul.mubr.bf16.gmra.mxu0 %v435
        %v517 = vpop.f32.mrf.mxu0
        %v518 = vadd.f32 %v364, %v517
        %v519 = vpop.f32.mrf.mxu0
        %v520 = vpop.f32.mrf.mxu0
        %v521 = vadd.f32 %v364, %v520
        %v522 = vpop.f32.mrf.mxu0
        %523 = vmatprep.mubr.bf16.mxu0 0
        %524 = vmatmul.mubr.bf16.gmra.mxu0 %v438
        %v525 = vpop.f32.mrf.mxu0
        %v526 = vadd.f32 %v364, %v525
        %v527 = vpop.f32.mrf.mxu0
        %v528 = vpop.f32.mrf.mxu0
        %v529 = vadd.f32 %v364, %v528
        %v530 = vpop.f32.mrf.mxu0
        %531 = vmatprep.mubr.bf16.mxu0 0
        %532 = vmatmul.mubr.bf16.gmra.mxu0 %v441
        %v533 = vpop.f32.mrf.mxu0
        %v534 = vadd.f32 %v364, %v533
        %v535 = vpop.f32.mrf.mxu0
        %v536 = vpop.f32.mrf.mxu0
        %v537 = vadd.f32 %v364, %v536
        %v538 = vpop.f32.mrf.mxu0
        %539 = vdwg.mxu0
        %540 = vst [vmem:[%s298] sm:$0xff] %v478
        %541 = vst [vmem:[%s298 + $0x8] sm:$0xff] %v481
        %542 = vst [vmem:[%s298 + $0x10] sm:$0xff] %v486
        %543 = vst [vmem:[%s298 + $0x18] sm:$0xff] %v489
        %544 = vst [vmem:[%s298 + $0x20] sm:$0xff] %v494
        %545 = vst [vmem:[%s298 + $0x28] sm:$0xff] %v497
        %546 = vst [vmem:[%s298 + $0x30] sm:$0xff] %v502
        %547 = vst [vmem:[%s298 + $0x38] sm:$0xff] %v505
        %548 = vst [vmem:[%s298 + $0x40] sm:$0xff] %v510
        %549 = vst [vmem:[%s298 + $0x48] sm:$0xff] %v513
        %550 = vst [vmem:[%s298 + $0x50] sm:$0xff] %v518
        %551 = vst [vmem:[%s298 + $0x58] sm:$0xff] %v521
        %552 = vst [vmem:[%s298 + $0x60] sm:$0xff] %v526
        %553 = vst [vmem:[%s298 + $0x68] sm:$0xff] %v529
        %554 = vst [vmem:[%s298 + $0x70] sm:$0xff] %v534
        %555 = vst [vmem:[%s298 + $0x78] sm:$0xff] %v537
        %v556 = vxor.u32 %v478, 2147483648
        %v557 = vxor.u32 %v481, 2147483648
        %v558 = vxor.u32 %v486, 2147483648
        %v559 = vxor.u32 %v489, 2147483648
        %v560 = vxor.u32 %v494, 2147483648
        %v561 = vxor.u32 %v497, 2147483648
        %v562 = vxor.u32 %v502, 2147483648
        %v563 = vxor.u32 %v505, 2147483648
        %v564 = vxor.u32 %v510, 2147483648
        %v565 = vxor.u32 %v513, 2147483648
        %v566 = vxor.u32 %v518, 2147483648
        %v567 = vxor.u32 %v521, 2147483648
        %v568 = vxor.u32 %v526, 2147483648
        %v569 = vxor.u32 %v529, 2147483648
        %v570 = vxor.u32 %v534, 2147483648
        %v571 = vxor.u32 %v537, 2147483648
        %v572 = vmul.f32 %v556, 1.442695
        %v573 = vpow.pop %v572
        %v574 = vmul.f32 %v557, 1.442695
        %v575 = vpow.pop %v574
        %v576 = vmul.f32 %v558, 1.442695
        %v577 = vpow.pop %v576
        %v578 = vmul.f32 %v559, 1.442695
        %v579 = vpow.pop %v578
        %v580 = vmul.f32 %v560, 1.442695
        %v581 = vpow.pop %v580
        %v582 = vmul.f32 %v561, 1.442695
        %v583 = vpow.pop %v582
        %v584 = vmul.f32 %v562, 1.442695
        %v585 = vpow.pop %v584
        %v586 = vmul.f32 %v563, 1.442695
        %v587 = vpow.pop %v586
        %v588 = vmul.f32 %v564, 1.442695
        %v589 = vpow.pop %v588
        %v590 = vmul.f32 %v565, 1.442695
        %v591 = vpow.pop %v590
        %v592 = vmul.f32 %v566, 1.442695
        %v593 = vpow.pop %v592
        %v594 = vmul.f32 %v567, 1.442695
        %v595 = vpow.pop %v594
        %v596 = vmul.f32 %v568, 1.442695
        %v597 = vpow.pop %v596
        %v598 = vmul.f32 %v569, 1.442695
        %v599 = vpow.pop %v598
        %v600 = vmul.f32 %v570, 1.442695
        %v601 = vpow.pop %v600
        %v602 = vmul.f32 %v571, 1.442695
        %v603 = vpow.pop %v602
        %v604 = vadd.f32 %v573, 1.0
        %v605 = vadd.f32 %v575, 1.0
        %v606 = vadd.f32 %v577, 1.0
        %v607 = vadd.f32 %v579, 1.0
        %v608 = vadd.f32 %v581, 1.0
        %v609 = vadd.f32 %v583, 1.0
        %v610 = vadd.f32 %v585, 1.0
        %v611 = vadd.f32 %v587, 1.0
        %v612 = vadd.f32 %v589, 1.0
        %v613 = vadd.f32 %v591, 1.0
        %v614 = vadd.f32 %v593, 1.0
        %v615 = vadd.f32 %v595, 1.0
        %v616 = vadd.f32 %v597, 1.0
        %v617 = vadd.f32 %v599, 1.0
        %v618 = vadd.f32 %v601, 1.0
        %v619 = vadd.f32 %v603, 1.0
        %v620 = vrcp.pop %v604
        %v621 = vmul.f32 1.0, %v620
        %v622 = vrcp.pop %v605
        %v623 = vmul.f32 1.0, %v622
        %v624 = vrcp.pop %v606
        %v625 = vmul.f32 1.0, %v624
        %v626 = vrcp.pop %v607
        %v627 = vmul.f32 1.0, %v626
        %v628 = vrcp.pop %v608
        %v629 = vmul.f32 1.0, %v628
        %v630 = vrcp.pop %v609
        %v631 = vmul.f32 1.0, %v630
        %v632 = vrcp.pop %v610
        %v633 = vmul.f32 1.0, %v632
        %v634 = vrcp.pop %v611
        %v635 = vmul.f32 1.0, %v634
        %v636 = vrcp.pop %v612
        %v637 = vmul.f32 1.0, %v636
        %v638 = vrcp.pop %v613
        %v639 = vmul.f32 1.0, %v638
        %v640 = vrcp.pop %v614
        %v641 = vmul.f32 1.0, %v640
        %v642 = vrcp.pop %v615
        %v643 = vmul.f32 1.0, %v642
        %v644 = vrcp.pop %v616
        %v645 = vmul.f32 1.0, %v644
        %v646 = vrcp.pop %v617
        %v647 = vmul.f32 1.0, %v646
        %v648 = vrcp.pop %v618
        %v649 = vmul.f32 1.0, %v648
        %v650 = vrcp.pop %v619
        %v651 = vmul.f32 1.0, %v650
        %v652 = vld [vmem:[%s333] sm:$0x1]
        %v653 = vld [vmem:[%s333 + $0x1] sm:$0x1]
        %v654 = vld [vmem:[%s333 + $0x2] sm:$0x1]
        %v655 = vld [vmem:[%s333 + $0x3] sm:$0x1]
        %v656 = vld [vmem:[%s333 + $0x4] sm:$0x1]
        %v657 = vld [vmem:[%s333 + $0x5] sm:$0x1]
        %v658 = vld [vmem:[%s333 + $0x6] sm:$0x1]
        %s659 = smul.u32 %s30, 4
        %s660 = sadd.s32 %s659, 1
        %s661 = sld [smem:[#allocation3 + %s660]]
        %s662 = sadd.s32 %s659, 2
        %s663 = sld [smem:[#allocation3 + %s662]]
        %s664 = sadd.s32 %s659, 3
        %s665 = sld [smem:[#allocation3 + %s664]]
        %v666 = vlaneseq
        %v667 = vshrl.u32 %v666, 7
        %v668 = vadd.s32 %v667, 8
        %v669 = vadd.s32 %v667, 16
        %v670 = vadd.s32 %v667, 24
        %v671 = vadd.s32 %v667, 32
        %v672 = vadd.s32 %v667, 40
        %v673 = vadd.s32 %v667, 48
        %v674 = vadd.s32 %v667, 56
        %v675 = vadd.s32 %v667, 64
        %v676 = vadd.s32 %v667, 72
        %v677 = vadd.s32 %v667, 80
        %v678 = vadd.s32 %v667, 88
        %v679 = vadd.s32 %v667, 96
        %v680 = vadd.s32 %v667, 104
        %v681 = vadd.s32 %v667, 112
        %v682 = vadd.s32 %v667, 120
        %v683 = vstv %s661
        %v684 = vadd.s32 %v667, %v683
        %v685 = vadd.s32 %v668, %v683
        %v686 = vadd.s32 %v669, %v683
        %v687 = vadd.s32 %v670, %v683
        %v688 = vadd.s32 %v671, %v683
        %v689 = vadd.s32 %v672, %v683
        %v690 = vadd.s32 %v673, %v683
        %v691 = vadd.s32 %v674, %v683
        %v692 = vadd.s32 %v675, %v683
        %v693 = vadd.s32 %v676, %v683
        %v694 = vadd.s32 %v677, %v683
        %v695 = vadd.s32 %v678, %v683
        %v696 = vadd.s32 %v679, %v683
        %v697 = vadd.s32 %v680, %v683
        %v698 = vadd.s32 %v681, %v683
        %v699 = vadd.s32 %v682, %v683
        %v700 = vcvt.s32.f32 %v684
        %v701 = vcvt.s32.f32 %v685
        %v702 = vcvt.s32.f32 %v686
        %v703 = vcvt.s32.f32 %v687
        %v704 = vcvt.s32.f32 %v688
        %v705 = vcvt.s32.f32 %v689
        %v706 = vcvt.s32.f32 %v690
        %v707 = vcvt.s32.f32 %v691
        %v708 = vcvt.s32.f32 %v692
        %v709 = vcvt.s32.f32 %v693
        %v710 = vcvt.s32.f32 %v694
        %v711 = vcvt.s32.f32 %v695
        %v712 = vcvt.s32.f32 %v696
        %v713 = vcvt.s32.f32 %v697
        %v714 = vcvt.s32.f32 %v698
        %v715 = vcvt.s32.f32 %v699
        %v716 = vstv %s663
        %v717 = vcvt.s32.f32 %v716
        %v718 = vstv %s665
        %v719 = vcvt.s32.f32 %v718
        %v720 = vrcp.pop %v717
        %v721 = vmul.f32 %v700, %v720
        %v722 = vmul.f32 %v701, %v720
        %v723 = vmul.f32 %v702, %v720
        %v724 = vmul.f32 %v703, %v720
        %v725 = vmul.f32 %v704, %v720
        %v726 = vmul.f32 %v705, %v720
        %v727 = vmul.f32 %v706, %v720
        %v728 = vmul.f32 %v707, %v720
        %v729 = vmul.f32 %v708, %v720
        %v730 = vmul.f32 %v709, %v720
        %v731 = vmul.f32 %v710, %v720
        %v732 = vmul.f32 %v711, %v720
        %v733 = vmul.f32 %v712, %v720
        %v734 = vmul.f32 %v713, %v720
        %v735 = vmul.f32 %v714, %v720
        %v736 = vmul.f32 %v715, %v720
        %v737 = vfloor.f32 %v721
        %v738 = vfloor.f32 %v722
        %v739 = vfloor.f32 %v723
        %v740 = vfloor.f32 %v724
        %v741 = vfloor.f32 %v725
        %v742 = vfloor.f32 %v726
        %v743 = vfloor.f32 %v727
        %v744 = vfloor.f32 %v728
        %v745 = vfloor.f32 %v729
        %v746 = vfloor.f32 %v730
        %v747 = vfloor.f32 %v731
        %v748 = vfloor.f32 %v732
        %v749 = vfloor.f32 %v733
        %v750 = vfloor.f32 %v734
        %v751 = vfloor.f32 %v735
        %v752 = vfloor.f32 %v736
        %v753 = vmul.f32 %v737, %v717
        %v754 = vmul.f32 %v738, %v717
        %v755 = vmul.f32 %v739, %v717
        %v756 = vmul.f32 %v740, %v717
        %v757 = vmul.f32 %v741, %v717
        %v758 = vmul.f32 %v742, %v717
        %v759 = vmul.f32 %v743, %v717
        %v760 = vmul.f32 %v744, %v717
        %v761 = vmul.f32 %v745, %v717
        %v762 = vmul.f32 %v746, %v717
        %v763 = vmul.f32 %v747, %v717
        %v764 = vmul.f32 %v748, %v717
        %v765 = vmul.f32 %v749, %v717
        %v766 = vmul.f32 %v750, %v717
        %v767 = vmul.f32 %v751, %v717
        %v768 = vmul.f32 %v752, %v717
        %v769 = vsub.f32 %v700, %v753
        %v770 = vsub.f32 %v701, %v754
        %v771 = vsub.f32 %v702, %v755
        %v772 = vsub.f32 %v703, %v756
        %v773 = vsub.f32 %v704, %v757
        %v774 = vsub.f32 %v705, %v758
        %v775 = vsub.f32 %v706, %v759
        %v776 = vsub.f32 %v707, %v760
        %v777 = vsub.f32 %v708, %v761
        %v778 = vsub.f32 %v709, %v762
        %v779 = vsub.f32 %v710, %v763
        %v780 = vsub.f32 %v711, %v764
        %v781 = vsub.f32 %v712, %v765
        %v782 = vsub.f32 %v713, %v766
        %v783 = vsub.f32 %v714, %v767
        %v784 = vsub.f32 %v715, %v768
        %v785 = vrcp.pop %v719
        %v786 = vmul.f32 %v737, %v785
        %v787 = vmul.f32 %v738, %v785
        %v788 = vmul.f32 %v739, %v785
        %v789 = vmul.f32 %v740, %v785
        %v790 = vmul.f32 %v741, %v785
        %v791 = vmul.f32 %v742, %v785
        %v792 = vmul.f32 %v743, %v785
        %v793 = vmul.f32 %v744, %v785
        %v794 = vmul.f32 %v745, %v785
        %v795 = vmul.f32 %v746, %v785
        %v796 = vmul.f32 %v747, %v785
        %v797 = vmul.f32 %v748, %v785
        %v798 = vmul.f32 %v749, %v785
        %v799 = vmul.f32 %v750, %v785
        %v800 = vmul.f32 %v751, %v785
        %v801 = vmul.f32 %v752, %v785
        %v802 = vfloor.f32 %v786
        %v803 = vfloor.f32 %v787
        %v804 = vfloor.f32 %v788
        %v805 = vfloor.f32 %v789
        %v806 = vfloor.f32 %v790
        %v807 = vfloor.f32 %v791
        %v808 = vfloor.f32 %v792
        %v809 = vfloor.f32 %v793
        %v810 = vfloor.f32 %v794
        %v811 = vfloor.f32 %v795
        %v812 = vfloor.f32 %v796
        %v813 = vfloor.f32 %v797
        %v814 = vfloor.f32 %v798
        %v815 = vfloor.f32 %v799
        %v816 = vfloor.f32 %v800
        %v817 = vfloor.f32 %v801
        %v818 = vmul.f32 %v802, %v719
        %v819 = vmul.f32 %v803, %v719
        %v820 = vmul.f32 %v804, %v719
        %v821 = vmul.f32 %v805, %v719
        %v822 = vmul.f32 %v806, %v719
        %v823 = vmul.f32 %v807, %v719
        %v824 = vmul.f32 %v808, %v719
        %v825 = vmul.f32 %v809, %v719
        %v826 = vmul.f32 %v810, %v719
        %v827 = vmul.f32 %v811, %v719
        %v828 = vmul.f32 %v812, %v719
        %v829 = vmul.f32 %v813, %v719
        %v830 = vmul.f32 %v814, %v719
        %v831 = vmul.f32 %v815, %v719
        %v832 = vmul.f32 %v816, %v719
        %v833 = vmul.f32 %v817, %v719
        %v834 = vsub.f32 %v737, %v818
        %v835 = vsub.f32 %v738, %v819
        %v836 = vsub.f32 %v739, %v820
        %v837 = vsub.f32 %v740, %v821
        %v838 = vsub.f32 %v741, %v822
        %v839 = vsub.f32 %v742, %v823
        %v840 = vsub.f32 %v743, %v824
        %v841 = vsub.f32 %v744, %v825
        %v842 = vsub.f32 %v745, %v826
        %v843 = vsub.f32 %v746, %v827
        %v844 = vsub.f32 %v747, %v828
        %v845 = vsub.f32 %v748, %v829
        %v846 = vsub.f32 %v749, %v830
        %v847 = vsub.f32 %v750, %v831
        %v848 = vsub.f32 %v751, %v832
        %v849 = vsub.f32 %v752, %v833
        %v850 = vlaneseq
        %v851 = vshrl.u32 %v850, 7
        %v852 = vsub.s32 0, %v851
        %v853 = vrot.slane %v654, %v852
        %v854 = vmul.f32 %v769, %v853
        %v855 = vmul.f32 %v770, %v853
        %v856 = vmul.f32 %v771, %v853
        %v857 = vmul.f32 %v772, %v853
        %v858 = vmul.f32 %v773, %v853
        %v859 = vmul.f32 %v774, %v853
        %v860 = vmul.f32 %v775, %v853
        %v861 = vmul.f32 %v776, %v853
        %v862 = vmul.f32 %v777, %v853
        %v863 = vmul.f32 %v778, %v853
        %v864 = vmul.f32 %v779, %v853
        %v865 = vmul.f32 %v780, %v853
        %v866 = vmul.f32 %v781, %v853
        %v867 = vmul.f32 %v782, %v853
        %v868 = vmul.f32 %v783, %v853
        %v869 = vmul.f32 %v784, %v853
        %v870 = vlaneseq
        %v871 = vshrl.u32 %v870, 7
        %v872 = vsub.s32 0, %v871
        %v873 = vrot.slane %v655, %v872
        %v874 = vmul.f32 %v834, %v873
        %v875 = vmul.f32 %v835, %v873
        %v876 = vmul.f32 %v836, %v873
        %v877 = vmul.f32 %v837, %v873
        %v878 = vmul.f32 %v838, %v873
        %v879 = vmul.f32 %v839, %v873
        %v880 = vmul.f32 %v840, %v873
        %v881 = vmul.f32 %v841, %v873
        %v882 = vmul.f32 %v842, %v873
        %v883 = vmul.f32 %v843, %v873
        %v884 = vmul.f32 %v844, %v873
        %v885 = vmul.f32 %v845, %v873
        %v886 = vmul.f32 %v846, %v873
        %v887 = vmul.f32 %v847, %v873
        %v888 = vmul.f32 %v848, %v873
        %v889 = vmul.f32 %v849, %v873
        %v890 = vadd.f32 %v854, %v874
        %v891 = vadd.f32 %v855, %v875
        %v892 = vadd.f32 %v856, %v876
        %v893 = vadd.f32 %v857, %v877
        %v894 = vadd.f32 %v858, %v878
        %v895 = vadd.f32 %v859, %v879
        %v896 = vadd.f32 %v860, %v880
        %v897 = vadd.f32 %v861, %v881
        %v898 = vadd.f32 %v862, %v882
        %v899 = vadd.f32 %v863, %v883
        %v900 = vadd.f32 %v864, %v884
        %v901 = vadd.f32 %v865, %v885
        %v902 = vadd.f32 %v866, %v886
        %v903 = vadd.f32 %v867, %v887
        %v904 = vadd.f32 %v868, %v888
        %v905 = vadd.f32 %v869, %v889
        %v906 = vmul.f32 %v621, 2.0
        %v907 = vmul.f32 %v623, 2.0
        %v908 = vmul.f32 %v625, 2.0
        %v909 = vmul.f32 %v627, 2.0
        %v910 = vmul.f32 %v629, 2.0
        %v911 = vmul.f32 %v631, 2.0
        %v912 = vmul.f32 %v633, 2.0
        %v913 = vmul.f32 %v635, 2.0
        %v914 = vmul.f32 %v637, 2.0
        %v915 = vmul.f32 %v639, 2.0
        %v916 = vmul.f32 %v641, 2.0
        %v917 = vmul.f32 %v643, 2.0
        %v918 = vmul.f32 %v645, 2.0
        %v919 = vmul.f32 %v647, 2.0
        %v920 = vmul.f32 %v649, 2.0
        %v921 = vmul.f32 %v651, 2.0
        %v922 = vsub.f32 %v906, 0.5
        %v923 = vsub.f32 %v907, 0.5
        %v924 = vsub.f32 %v908, 0.5
        %v925 = vsub.f32 %v909, 0.5
        %v926 = vsub.f32 %v910, 0.5
        %v927 = vsub.f32 %v911, 0.5
        %v928 = vsub.f32 %v912, 0.5
        %v929 = vsub.f32 %v913, 0.5
        %v930 = vsub.f32 %v914, 0.5
        %v931 = vsub.f32 %v915, 0.5
        %v932 = vsub.f32 %v916, 0.5
        %v933 = vsub.f32 %v917, 0.5
        %v934 = vsub.f32 %v918, 0.5
        %v935 = vsub.f32 %v919, 0.5
        %v936 = vsub.f32 %v920, 0.5
        %v937 = vsub.f32 %v921, 0.5
        %v938 = vadd.f32 %v922, %v890
        %v939 = vadd.f32 %v923, %v891
        %v940 = vadd.f32 %v924, %v892
        %v941 = vadd.f32 %v925, %v893
        %v942 = vadd.f32 %v926, %v894
        %v943 = vadd.f32 %v927, %v895
        %v944 = vadd.f32 %v928, %v896
        %v945 = vadd.f32 %v929, %v897
        %v946 = vadd.f32 %v930, %v898
        %v947 = vadd.f32 %v931, %v899
        %v948 = vadd.f32 %v932, %v900
        %v949 = vadd.f32 %v933, %v901
        %v950 = vadd.f32 %v934, %v902
        %v951 = vadd.f32 %v935, %v903
        %v952 = vadd.f32 %v936, %v904
        %v953 = vadd.f32 %v937, %v905
        %v954 = vlaneseq
        %v955 = vshrl.u32 %v954, 7
        %v956 = vsub.s32 0, %v955
        %v957 = vrot.slane %v652, %v956
        %v958 = vmul.f32 %v938, %v957
        %v959 = vmul.f32 %v939, %v957
        %v960 = vmul.f32 %v940, %v957
        %v961 = vmul.f32 %v941, %v957
        %v962 = vmul.f32 %v942, %v957
        %v963 = vmul.f32 %v943, %v957
        %v964 = vmul.f32 %v944, %v957
        %v965 = vmul.f32 %v945, %v957
        %v966 = vmul.f32 %v946, %v957
        %v967 = vmul.f32 %v947, %v957
        %v968 = vmul.f32 %v948, %v957
        %v969 = vmul.f32 %v949, %v957
        %v970 = vmul.f32 %v950, %v957
        %v971 = vmul.f32 %v951, %v957
        %v972 = vmul.f32 %v952, %v957
        %v973 = vmul.f32 %v953, %v957
        %v974 = vmul.f32 %v906, %v906
        %v975 = vmul.f32 %v907, %v907
        %v976 = vmul.f32 %v908, %v908
        %v977 = vmul.f32 %v909, %v909
        %v978 = vmul.f32 %v910, %v910
        %v979 = vmul.f32 %v911, %v911
        %v980 = vmul.f32 %v912, %v912
        %v981 = vmul.f32 %v913, %v913
        %v982 = vmul.f32 %v914, %v914
        %v983 = vmul.f32 %v915, %v915
        %v984 = vmul.f32 %v916, %v916
        %v985 = vmul.f32 %v917, %v917
        %v986 = vmul.f32 %v918, %v918
        %v987 = vmul.f32 %v919, %v919
        %v988 = vmul.f32 %v920, %v920
        %v989 = vmul.f32 %v921, %v921
        %v990 = vlaneseq
        %v991 = vshrl.u32 %v990, 7
        %v992 = vsub.s32 0, %v991
        %v993 = vrot.slane %v653, %v992
        %v994 = vmul.f32 %v974, %v993
        %v995 = vmul.f32 %v975, %v993
        %v996 = vmul.f32 %v976, %v993
        %v997 = vmul.f32 %v977, %v993
        %v998 = vmul.f32 %v978, %v993
        %v999 = vmul.f32 %v979, %v993
        %v1000 = vmul.f32 %v980, %v993
        %v1001 = vmul.f32 %v981, %v993
        %v1002 = vmul.f32 %v982, %v993
        %v1003 = vmul.f32 %v983, %v993
        %v1004 = vmul.f32 %v984, %v993
        %v1005 = vmul.f32 %v985, %v993
        %v1006 = vmul.f32 %v986, %v993
        %v1007 = vmul.f32 %v987, %v993
        %v1008 = vmul.f32 %v988, %v993
        %v1009 = vmul.f32 %v989, %v993
        %1010 = vrot.lane.b32.xlu0 %v994, 126
        %v1011 = vpop.permute.xlu0 %1010
        %1012 = vrot.lane.b32.xlu0 %v995, 126
        %v1013 = vpop.permute.xlu0 %1012
        %1014 = vrot.lane.b32.xlu0 %v996, 126
        %v1015 = vpop.permute.xlu0 %1014
        %1016 = vrot.lane.b32.xlu0 %v997, 126
        %v1017 = vpop.permute.xlu0 %1016
        %1018 = vrot.lane.b32.xlu0 %v998, 126
        %v1019 = vpop.permute.xlu0 %1018
        %1020 = vrot.lane.b32.xlu0 %v999, 126
        %v1021 = vpop.permute.xlu0 %1020
        %1022 = vrot.lane.b32.xlu0 %v1000, 126
        %v1023 = vpop.permute.xlu0 %1022
        %1024 = vrot.lane.b32.xlu0 %v1001, 126
        %v1025 = vpop.permute.xlu0 %1024
        %1026 = vrot.lane.b32.xlu0 %v1002, 126
        %v1027 = vpop.permute.xlu0 %1026
        %1028 = vrot.lane.b32.xlu0 %v1003, 126
        %v1029 = vpop.permute.xlu0 %1028
        %1030 = vrot.lane.b32.xlu0 %v1004, 126
        %v1031 = vpop.permute.xlu0 %1030
        %1032 = vrot.lane.b32.xlu0 %v1005, 126
        %v1033 = vpop.permute.xlu0 %1032
        %1034 = vrot.lane.b32.xlu0 %v1006, 126
        %v1035 = vpop.permute.xlu0 %1034
        %1036 = vrot.lane.b32.xlu0 %v1007, 126
        %v1037 = vpop.permute.xlu0 %1036
        %1038 = vrot.lane.b32.xlu0 %v1008, 126
        %v1039 = vpop.permute.xlu0 %1038
        %1040 = vrot.lane.b32.xlu0 %v1009, 126
        %v1041 = vpop.permute.xlu0 %1040
        %v1042 = vmul.f32 %v1011, 0.5
        %v1043 = vmul.f32 %v1013, 0.5
        %v1044 = vmul.f32 %v1015, 0.5
        %v1045 = vmul.f32 %v1017, 0.5
        %v1046 = vmul.f32 %v1019, 0.5
        %v1047 = vmul.f32 %v1021, 0.5
        %v1048 = vmul.f32 %v1023, 0.5
        %v1049 = vmul.f32 %v1025, 0.5
        %v1050 = vmul.f32 %v1027, 0.5
        %v1051 = vmul.f32 %v1029, 0.5
        %v1052 = vmul.f32 %v1031, 0.5
        %v1053 = vmul.f32 %v1033, 0.5
        %v1054 = vmul.f32 %v1035, 0.5
        %v1055 = vmul.f32 %v1037, 0.5
        %v1056 = vmul.f32 %v1039, 0.5
        %v1057 = vmul.f32 %v1041, 0.5
        %v1058 = vsub.f32 %v958, %v1042
        %v1059 = vsub.f32 %v959, %v1043
        %v1060 = vsub.f32 %v960, %v1044
        %v1061 = vsub.f32 %v961, %v1045
        %v1062 = vsub.f32 %v962, %v1046
        %v1063 = vsub.f32 %v963, %v1047
        %v1064 = vsub.f32 %v964, %v1048
        %v1065 = vsub.f32 %v965, %v1049
        %v1066 = vsub.f32 %v966, %v1050
        %v1067 = vsub.f32 %v967, %v1051
        %v1068 = vsub.f32 %v968, %v1052
        %v1069 = vsub.f32 %v969, %v1053
        %v1070 = vsub.f32 %v970, %v1054
        %v1071 = vsub.f32 %v971, %v1055
        %v1072 = vsub.f32 %v972, %v1056
        %v1073 = vsub.f32 %v973, %v1057
        %1074 = vrot.lane.b32.xlu0 %v958, 2
        %v1075 = vpop.permute.xlu0 %1074
        %1076 = vrot.lane.b32.xlu0 %v959, 2
        %v1077 = vpop.permute.xlu0 %1076
        %1078 = vrot.lane.b32.xlu0 %v960, 2
        %v1079 = vpop.permute.xlu0 %1078
        %1080 = vrot.lane.b32.xlu0 %v961, 2
        %v1081 = vpop.permute.xlu0 %1080
        %1082 = vrot.lane.b32.xlu0 %v962, 2
        %v1083 = vpop.permute.xlu0 %1082
        %1084 = vrot.lane.b32.xlu0 %v963, 2
        %v1085 = vpop.permute.xlu0 %1084
        %1086 = vrot.lane.b32.xlu0 %v964, 2
        %v1087 = vpop.permute.xlu0 %1086
        %1088 = vrot.lane.b32.xlu0 %v965, 2
        %v1089 = vpop.permute.xlu0 %1088
        %1090 = vrot.lane.b32.xlu0 %v966, 2
        %v1091 = vpop.permute.xlu0 %1090
        %1092 = vrot.lane.b32.xlu0 %v967, 2
        %v1093 = vpop.permute.xlu0 %1092
        %1094 = vrot.lane.b32.xlu0 %v968, 2
        %v1095 = vpop.permute.xlu0 %1094
        %1096 = vrot.lane.b32.xlu0 %v969, 2
        %v1097 = vpop.permute.xlu0 %1096
        %1098 = vrot.lane.b32.xlu0 %v970, 2
        %v1099 = vpop.permute.xlu0 %1098
        %1100 = vrot.lane.b32.xlu0 %v971, 2
        %v1101 = vpop.permute.xlu0 %1100
        %1102 = vrot.lane.b32.xlu0 %v972, 2
        %v1103 = vpop.permute.xlu0 %1102
        %1104 = vrot.lane.b32.xlu0 %v973, 2
        %v1105 = vpop.permute.xlu0 %1104
        %v1106 = vmul.f32 %v994, 0.5
        %v1107 = vmul.f32 %v995, 0.5
        %v1108 = vmul.f32 %v996, 0.5
        %v1109 = vmul.f32 %v997, 0.5
        %v1110 = vmul.f32 %v998, 0.5
        %v1111 = vmul.f32 %v999, 0.5
        %v1112 = vmul.f32 %v1000, 0.5
        %v1113 = vmul.f32 %v1001, 0.5
        %v1114 = vmul.f32 %v1002, 0.5
        %v1115 = vmul.f32 %v1003, 0.5
        %v1116 = vmul.f32 %v1004, 0.5
        %v1117 = vmul.f32 %v1005, 0.5
        %v1118 = vmul.f32 %v1006, 0.5
        %v1119 = vmul.f32 %v1007, 0.5
        %v1120 = vmul.f32 %v1008, 0.5
        %v1121 = vmul.f32 %v1009, 0.5
        %v1122 = vadd.f32 %v1075, %v1106
        %v1123 = vadd.f32 %v1077, %v1107
        %v1124 = vadd.f32 %v1079, %v1108
        %v1125 = vadd.f32 %v1081, %v1109
        %v1126 = vadd.f32 %v1083, %v1110
        %v1127 = vadd.f32 %v1085, %v1111
        %v1128 = vadd.f32 %v1087, %v1112
        %v1129 = vadd.f32 %v1089, %v1113
        %v1130 = vadd.f32 %v1091, %v1114
        %v1131 = vadd.f32 %v1093, %v1115
        %v1132 = vadd.f32 %v1095, %v1116
        %v1133 = vadd.f32 %v1097, %v1117
        %v1134 = vadd.f32 %v1099, %v1118
        %v1135 = vadd.f32 %v1101, %v1119
        %v1136 = vadd.f32 %v1103, %v1120
        %v1137 = vadd.f32 %v1105, %v1121
        %v1138 = vlaneseq
        %v1139 = vshrl.u32 %v1138, 7
        %v1140 = vsub.s32 0, %v1139
        %v1141 = vrot.slane %v656, %v1140
        %v1142 = vmul.f32 %v1141, %v1058
        %v1143 = vmul.f32 %v1141, %v1059
        %v1144 = vmul.f32 %v1141, %v1060
        %v1145 = vmul.f32 %v1141, %v1061
        %v1146 = vmul.f32 %v1141, %v1062
        %v1147 = vmul.f32 %v1141, %v1063
        %v1148 = vmul.f32 %v1141, %v1064
        %v1149 = vmul.f32 %v1141, %v1065
        %v1150 = vmul.f32 %v1141, %v1066
        %v1151 = vmul.f32 %v1141, %v1067
        %v1152 = vmul.f32 %v1141, %v1068
        %v1153 = vmul.f32 %v1141, %v1069
        %v1154 = vmul.f32 %v1141, %v1070
        %v1155 = vmul.f32 %v1141, %v1071
        %v1156 = vmul.f32 %v1141, %v1072
        %v1157 = vmul.f32 %v1141, %v1073
        %v1158 = vlaneseq
        %v1159 = vshrl.u32 %v1158, 7
        %v1160 = vsub.s32 0, %v1159
        %v1161 = vrot.slane %v657, %v1160
        %v1162 = vmul.f32 %v1161, %v1122
        %v1163 = vmul.f32 %v1161, %v1123
        %v1164 = vmul.f32 %v1161, %v1124
        %v1165 = vmul.f32 %v1161, %v1125
        %v1166 = vmul.f32 %v1161, %v1126
        %v1167 = vmul.f32 %v1161, %v1127
        %v1168 = vmul.f32 %v1161, %v1128
        %v1169 = vmul.f32 %v1161, %v1129
        %v1170 = vmul.f32 %v1161, %v1130
        %v1171 = vmul.f32 %v1161, %v1131
        %v1172 = vmul.f32 %v1161, %v1132
        %v1173 = vmul.f32 %v1161, %v1133
        %v1174 = vmul.f32 %v1161, %v1134
        %v1175 = vmul.f32 %v1161, %v1135
        %v1176 = vmul.f32 %v1161, %v1136
        %v1177 = vmul.f32 %v1161, %v1137
        %v1178 = vadd.f32 %v1142, %v1162
        %v1179 = vadd.f32 %v1143, %v1163
        %v1180 = vadd.f32 %v1144, %v1164
        %v1181 = vadd.f32 %v1145, %v1165
        %v1182 = vadd.f32 %v1146, %v1166
        %v1183 = vadd.f32 %v1147, %v1167
        %v1184 = vadd.f32 %v1148, %v1168
        %v1185 = vadd.f32 %v1149, %v1169
        %v1186 = vadd.f32 %v1150, %v1170
        %v1187 = vadd.f32 %v1151, %v1171
        %v1188 = vadd.f32 %v1152, %v1172
        %v1189 = vadd.f32 %v1153, %v1173
        %v1190 = vadd.f32 %v1154, %v1174
        %v1191 = vadd.f32 %v1155, %v1175
        %v1192 = vadd.f32 %v1156, %v1176
        %v1193 = vadd.f32 %v1157, %v1177
        %v1194 = vlaneseq
        %v1195 = vshrl.u32 %v1194, 7
        %v1196 = vsub.s32 0, %v1195
        %v1197 = vrot.slane %v658, %v1196
        %v1198 = vmul.f32 %v1197, %v621
        %v1199 = vmul.f32 %v1197, %v623
        %v1200 = vmul.f32 %v1197, %v625
        %v1201 = vmul.f32 %v1197, %v627
        %v1202 = vmul.f32 %v1197, %v629
        %v1203 = vmul.f32 %v1197, %v631
        %v1204 = vmul.f32 %v1197, %v633
        %v1205 = vmul.f32 %v1197, %v635
        %v1206 = vmul.f32 %v1197, %v637
        %v1207 = vmul.f32 %v1197, %v639
        %v1208 = vmul.f32 %v1197, %v641
        %v1209 = vmul.f32 %v1197, %v643
        %v1210 = vmul.f32 %v1197, %v645
        %v1211 = vmul.f32 %v1197, %v647
        %v1212 = vmul.f32 %v1197, %v649
        %v1213 = vmul.f32 %v1197, %v651
        %v1214 = vadd.f32 %v1178, %v1198
        %v1215 = vadd.f32 %v1179, %v1199
        %v1216 = vadd.f32 %v1180, %v1200
        %v1217 = vadd.f32 %v1181, %v1201
        %v1218 = vadd.f32 %v1182, %v1202
        %v1219 = vadd.f32 %v1183, %v1203
        %v1220 = vadd.f32 %v1184, %v1204
        %v1221 = vadd.f32 %v1185, %v1205
        %v1222 = vadd.f32 %v1186, %v1206
        %v1223 = vadd.f32 %v1187, %v1207
        %v1224 = vadd.f32 %v1188, %v1208
        %v1225 = vadd.f32 %v1189, %v1209
        %v1226 = vadd.f32 %v1190, %v1210
        %v1227 = vadd.f32 %v1191, %v1211
        %v1228 = vadd.f32 %v1192, %v1212
        %v1229 = vadd.f32 %v1193, %v1213
        %1230 = vst [vmem:[%s305] sm:$0xff] %v1214
        %1231 = vst [vmem:[%s305 + $0x8] sm:$0xff] %v1215
        %1232 = vst [vmem:[%s305 + $0x10] sm:$0xff] %v1216
        %1233 = vst [vmem:[%s305 + $0x18] sm:$0xff] %v1217
        %1234 = vst [vmem:[%s305 + $0x20] sm:$0xff] %v1218
        %1235 = vst [vmem:[%s305 + $0x28] sm:$0xff] %v1219
        %1236 = vst [vmem:[%s305 + $0x30] sm:$0xff] %v1220
        %1237 = vst [vmem:[%s305 + $0x38] sm:$0xff] %v1221
        %1238 = vst [vmem:[%s305 + $0x40] sm:$0xff] %v1222
        %1239 = vst [vmem:[%s305 + $0x48] sm:$0xff] %v1223
        %1240 = vst [vmem:[%s305 + $0x50] sm:$0xff] %v1224
        %1241 = vst [vmem:[%s305 + $0x58] sm:$0xff] %v1225
        %1242 = vst [vmem:[%s305 + $0x60] sm:$0xff] %v1226
        %1243 = vst [vmem:[%s305 + $0x68] sm:$0xff] %v1227
        %1244 = vst [vmem:[%s305 + $0x70] sm:$0xff] %v1228
        %1245 = vst [vmem:[%s305 + $0x78] sm:$0xff] %v1229
        %s1246 = sand.u32 %s154, 1
        %s1247 = scalar_lea.sflag [#allocation5], %s1246
        %s1248 = sand.u32 %s154, 1
        %s1249 = smul.addr %s1248, 128
        %s1250 = scalar_lea.vmem [#allocation4], %s1249
        %s1251 = sand.u32 %s180, 1
        %s1252 = scalar_lea.sflag [#allocation7], %s1251
        %s1253 = sand.u32 %s180, 1
        %s1254 = smul.addr %s1253, 128
        %s1255 = scalar_lea.vmem [#allocation6], %s1254
        // Predicated region
        $region37: #{tpu_custom_call.1} parent=35 // pred_check
          %p1256 = pneg %p164
        $region38: #{tpu_custom_call.1} parent=35 // pred_check_branch
          %1258 = sbr.rel (%p1256) target = $region40
        $region39: #{tpu_custom_call.1} parent=35 // pred_region
          %s1259 = smul.u32 16, %s30
          %s1261 = ssub.s32 2048, 2048
          %1262 = vsyncadd %s1247, %s1261
          %s1263 = smul.addr %s1259, 128
          %s1264 = scalar_lea.hbm %s5, %s1263
          %s1265 = sshll.u32 %s1250, 4
          %s1266 = int_to_ptr.vmem [resolvable:$true] %s1265
          %1271 = dma.vmem_to_hbm [thread:$0]  %s1266, 2048, %s1264, %s1247, 128, 128, 8
        $region40: #{tpu_custom_call.1} parent=35 // pred_fallthru
          _
        // Predicated region
        $region41: #{tpu_custom_call.1} parent=35 // pred_check
          %p1272 = pneg %p190
        $region42: #{tpu_custom_call.1} parent=35 // pred_check_branch
          %1274 = sbr.rel (%p1272) target = $region44
        $region43: #{tpu_custom_call.1} parent=35 // pred_region
          %s1275 = smul.u32 16, %s30
          %s1277 = ssub.s32 2048, 2048
          %1278 = vsyncadd %s1252, %s1277
          %s1279 = smul.addr %s1275, 128
          %s1280 = scalar_lea.hbm %s6, %s1279
          %s1281 = sshll.u32 %s1255, 4
          %s1282 = int_to_ptr.vmem [resolvable:$true] %s1281
          %1287 = dma.vmem_to_hbm [thread:$0]  %s1282, 2048, %s1280, %s1252, 128, 128, 8
        $region44: #{tpu_custom_call.1} parent=35 // pred_fallthru
          _
      $region36: #{tpu_custom_call.1} parent=5 // pred_fallthru
        _
      %p1288 = scmp.le.s32.totalorder 2, %s25
      // Predicated region
      $region45: #{tpu_custom_call.1} parent=5 // pred_check
        %p1289 = pneg %p1288
      $region46: #{tpu_custom_call.1} parent=5 // pred_check_branch
        %1291 = sbr.rel (%p1289) target = $region48
      $region47: #{tpu_custom_call.1} parent=5 // pred_region
        %s1292 = ssub.s32 %s25, 2
        // Predicated region
        $region49: #{tpu_custom_call.1} parent=47 // pred_check
          %p1293 = pneg %p170
        $region50: #{tpu_custom_call.1} parent=47 // pred_check_branch
          %1295 = sbr.rel (%p1293) target = $region52
        $region51: #{tpu_custom_call.1} parent=47 // pred_region
          %s1296 = sand.u32 %s155, 1
          %s1297 = scalar_lea.sflag [#allocation5], %s1296
          %s1298 = sand.u32 %s155, 1
          %s1299 = smul.addr %s1298, 128
          %s1300 = scalar_lea.vmem [#allocation4], %s1299
          %1301 = dma.done %s1297, 2048
        $region52: #{tpu_custom_call.1} parent=47 // pred_fallthru
          _
        // Predicated region
        $region53: #{tpu_custom_call.1} parent=47 // pred_check
          %p1302 = pneg %p196
        $region54: #{tpu_custom_call.1} parent=47 // pred_check_branch
          %1304 = sbr.rel (%p1302) target = $region56
        $region55: #{tpu_custom_call.1} parent=47 // pred_region
          %s1305 = sand.u32 %s181, 1
          %s1306 = scalar_lea.sflag [#allocation7], %s1305
          %s1307 = sand.u32 %s181, 1
          %s1308 = smul.addr %s1307, 128
          %s1309 = scalar_lea.vmem [#allocation6], %s1308
          %1310 = dma.done %s1306, 2048
        $region56: #{tpu_custom_call.1} parent=47 // pred_fallthru
          _
      $region48: #{tpu_custom_call.1} parent=5 // pred_fallthru
        _
    $region6: #{tpu_custom_call.1} parent=1 // loop_footer
      %s29 = sadd.s32 1, %s25
    $region7: #{tpu_custom_call.1} parent=1 // loop_footer_branch
      %24 = sbr.rel target = $region3
    $region8: #{tpu_custom_call.1} parent=1 // loop_exit
      _
    %1311 = vsyncpa [#allocation5], 1
    %s1312 = scalar_lea.sflag [#allocation5], 1
    %1313 = vsyncpa %s1312, 1
    %1314 = vsyncpa [#allocation7], 1
    %s1315 = scalar_lea.sflag [#allocation7], 1
    %1316 = vsyncpa %s1315, 1

</llo_original>
